<compile_context>
chip_gen: v7x
topology: tpu7x:2x2x1
jax: 0.10.0
libtpu: 0.0.40
codegen_flags: <defaults>
</compile_context>

<pallas_src>
import functools

import jax
import jax.numpy as jnp
from jax import lax
from jax.experimental import pallas as pl
from jax.experimental.pallas import tpu as pltpu


def _random_u32(shape, col0, num_features, seed_u32, salt):
    """Stateless counter-based uniform uint32 bits (murmur3 fmix32 finalizer).

    Pure function of (seed, salt, row, global feature column) -> tiling-invariant mask.
    """
    r = lax.broadcasted_iota(jnp.int32, shape, 0)
    c = lax.broadcasted_iota(jnp.int32, shape, 1) + col0
    x = (r * num_features + c).astype(jnp.uint32)
    x = x ^ (seed_u32 * jnp.uint32(0x9E3779B1) + jnp.uint32(salt))
    x = x ^ (x >> 16)
    x = x * jnp.uint32(0x85EBCA6B)
    x = x ^ (x >> 13)
    x = x * jnp.uint32(0xC2B2AE35)
    x = x ^ (x >> 16)
    return x


def _residual_block_kernel(seed_ref, x_ref, w1_ref, w2_ref,
                           g1_ref, be1_ref, g2_ref, be2_ref,
                           out_ref, h_ref, *scratch,
                           p_dropout, neg_slope, eps, tile_f, num_f):
    phase = pl.program_id(0)          # 0: Linear1 half, 1: Linear2 half
    j = pl.program_id(1)              # feature-tile index
    col = pl.multiple_of(j * tile_f, tile_f)
    seed_u32 = seed_ref[0].astype(jnp.uint32)
    x_mm_ref = scratch[0] if scratch else None   # matmul-dtype copy of x (only if casting)

    def act(y):
        if neg_slope == 0.0:
            return jnp.maximum(y, 0.0)
        return jnp.where(y > 0, y, y * neg_slope)

    def batch_norm(y, gamma, beta):
        # Training-mode BN folded into a per-feature affine: y*scale + shift.
        # Centered two-pass variance (numerically stable); rsqrt goes to the EUP slot.
        mean = jnp.mean(y, axis=0, keepdims=True)
        diff = y - mean
        var = jnp.mean(diff * diff, axis=0, keepdims=True)
        scale = gamma * lax.rsqrt(var + eps)
        shift = beta - mean * scale
        return y * scale + shift

    def dropout(y, salt):
        if p_dropout <= 0.0:
            return y
        thr = jnp.uint32(min(int(p_dropout * 4294967296.0), 4294967295))
        inv_keep = jnp.float32(1.0 / (1.0 - p_dropout))
        bits = _random_u32(y.shape, col, num_f, seed_u32, salt)
        return y * jnp.where(bits >= thr, inv_keep, jnp.float32(0.0))

    @pl.when(phase == 0)
    def _():
        # hidden[:, col:col+tf] = dropout(act(BN1(x @ W1t[:, col:col+tf])))
        if x_mm_ref is None:
            x_mm = x_ref[...]
        else:
            # Hoisted cast: materialize x in the matmul dtype once (first phase-0 step)
            # instead of re-casting the full (n, f) array on every grid iteration.
            @pl.when(j == 0)
            def _():
                x_mm_ref[...] = x_ref[...].astype(x_mm_ref.dtype)
            x_mm = x_mm_ref[...]
        y = jnp.dot(x_mm, w1_ref[...], preferred_element_type=jnp.float32)
        y = batch_norm(y, g1_ref[...], be1_ref[...])
        y = dropout(act(y), salt=0x243F6A88)
        h_ref[:, pl.ds(col, tile_f)] = y.astype(h_ref.dtype)

    @pl.when(phase == 1)
    def _():
        # out[:, col:col+tf] = x[:, col:col+tf] + dropout(act(BN2(h @ W2t[:, col:col+tf])))
        # NOTE: out_ref is only written here. Its block index is constant (0, 0) throughout
        # phase 0, so Pallas never flushes the untouched buffer early; keep the output
        # index_map `(0, j * p)` in sync with this assumption.
        y = jnp.dot(h_ref[...], w2_ref[...], preferred_element_type=jnp.float32)
        y = batch_norm(y, g2_ref[...], be2_ref[...])
        y = dropout(act(y), salt=0x85A308D3)
        out_ref[...] = (x_ref[:, pl.ds(col, tile_f)] + y).astype(out_ref.dtype)


def _vmem_capacity_bytes():
    try:
        return int(pltpu.get_tpu_info().vmem_capacity_bytes)
    except Exception:
        return 64 * 1024 * 1024          # conservative fallback: smallest per-core VMEM (v7x)


def _vmem_need_bytes(n, f, tf, x_item, mm_item, cast_x):
    """Working-set estimate for a given tiling (conservative: x double-buffered)."""
    need = 2 * n * f * x_item            # x input (2 bufs if single-buffering unavailable)
    need += n * f * mm_item              # hidden-activation scratch
    if cast_x:
        need += n * f * mm_item          # hoisted x-cast scratch
    need += 4 * f * tf * mm_item         # W1^T + W2^T streams, double-buffered
    need += 2 * n * tf * x_item          # output tile, double-buffered
    need += 8 * 2 * tf * 4               # gamma/beta tiles
    return need


def _pick_tile_f(f, n, x_item, mm_item, cast_x, budget):
    """Largest feature tile whose working set fits the per-generation VMEM budget."""
    if f % 128 != 0:
        return f                          # single full-width tile (block == full dim is OK)
    cands = [c for c in (1024, 512, 256, 128) if f % c == 0]
    for c in cands:
        if _vmem_need_bytes(n, f, c, x_item, mm_item, cast_x) <= budget:
            return c
    # Even the smallest tile exceeds the budget (very large n*f): take it anyway.
    # TODO(synk): tile the batch with a partial-sum BN pass instead of full x/h residency.
    return cands[-1]


def residual_block(x, params, seed, *, p_dropout=0.5, leaky=False, eps=1e-5,
                   matmul_dtype=jnp.bfloat16):
    """Fused ResidualBlock forward (training-mode BatchNorm + Dropout).

    matmul_dtype: dtype of the streamed weights / hidden scratch (MXU input dtype).
      bf16 (default) halves the HBM weight traffic; accumulation is always f32.
      Pass jnp.float32 to match the PyTorch f32 reference as closely as possible.
    """
    n, f = x.shape
    mm_dtype = jnp.dtype(matmul_dtype)
    x_dtype = jnp.dtype(x.dtype)
    cast_x = mm_dtype != x_dtype

    vmem_cap = _vmem_capacity_bytes()
    budget = vmem_cap * 3 // 4            # leave headroom for compiler-internal scratch
    x_item = x_dtype.itemsize
    mm_item = mm_dtype.itemsize
    tf = _pick_tile_f(f, n, x_item, mm_item, cast_x, budget)
    nf = f // tf

    w1 = params["w1_t"]                   # (F_in, F_out) — already transposed, no per-call .T
    w2 = params["w2_t"]
    if w1.dtype != mm_dtype:
        # For production, store the weights in mm_dtype at load time instead of per call.
        w1 = w1.astype(mm_dtype)
        w2 = w2.astype(mm_dtype)

    g1 = params["gamma1"].reshape(1, f).astype(jnp.float32)
    be1 = params["beta1"].reshape(1, f).astype(jnp.float32)
    g2 = params["gamma2"].reshape(1, f).astype(jnp.float32)
    be2 = params["beta2"].reshape(1, f).astype(jnp.float32)
    # NOTE: Linear biases b1/b2 are intentionally NOT passed to the kernel — a per-feature
    # constant added right before a training-mode BatchNorm cancels exactly in (y - mean).

    seed_arr = jnp.asarray(seed, dtype=jnp.int32).reshape((1,))

    kernel = functools.partial(
        _residual_block_kernel,
        p_dropout=float(p_dropout),
        neg_slope=0.01 if leaky else 0.0,
        eps=float(eps),
        tile_f=tf,
        num_f=f,
    )

    need = _vmem_need_bytes(n, f, tf, x_item, mm_item, cast_x)
    headroom_cap = vmem_cap - vmem_cap // 8        # never request all of physical VMEM
    vmem_limit = min(max(need * 5 // 4, 32 * 1024 * 1024), headroom_cap)
    if need > vmem_limit:                          # never clamp below the working set
        vmem_limit = min(need, headroom_cap)
    vmem_limit = int(vmem_limit)

    scratch_shapes = [pltpu.VMEM((n, f), mm_dtype)]            # hidden activation
    if cast_x:
        scratch_shapes.append(pltpu.VMEM((n, f), mm_dtype))    # hoisted x cast

    def _call(single_buffer_x):
        if single_buffer_x:
            # x has a constant block index and is fetched exactly once; a second pipeline
            # buffer only wastes n*f*itemsize of VMEM.
            x_spec = pl.BlockSpec((n, f), lambda p, j, s: (0, 0),
                                  pipeline_mode=pl.Buffered(1))
        else:
            x_spec = pl.BlockSpec((n, f), lambda p, j, s: (0, 0))

        grid_spec = pltpu.PrefetchScalarGridSpec(
            num_scalar_prefetch=1,
            grid=(2, nf),                                           # (phase, feature tile)
            in_specs=[
                x_spec,                                             # x: VMEM-resident (BN needs full batch)
                pl.BlockSpec((f, tf),                               # W1^T column tile: streams in phase 0,
                             lambda p, j, s: (0, j * (1 - p) + (nf - 1) * p)),  # frozen in phase 1
                pl.BlockSpec((f, tf), lambda p, j, s: (0, j * p)),  # W2^T column tile: streams in phase 1
                pl.BlockSpec((1, tf), lambda p, j, s: (0, j)),      # gamma1 tile
                pl.BlockSpec((1, tf), lambda p, j, s: (0, j)),      # beta1 tile
                pl.BlockSpec((1, tf), lambda p, j, s: (0, j)),      # gamma2 tile
                pl.BlockSpec((1, tf), lambda p, j, s: (0, j)),      # beta2 tile
            ],
            # Written only in phase 1; index stays (0, 0) through phase 0 so the untouched
            # buffer is never written back early (see kernel comment).
            out_specs=pl.BlockSpec((n, tf), lambda p, j, s: (0, j * p)),
            scratch_shapes=scratch_shapes,
        )
        return pl.pallas_call(
            kernel,
            out_shape=jax.ShapeDtypeStruct((n, f), x.dtype),
            grid_spec=grid_spec,
            compiler_params=pltpu.CompilerParams(
                # Phase 1 reads the whole hidden scratch written in phase 0, so both grid
                # axes must run sequentially on a single core.
                dimension_semantics=("arbitrary", "arbitrary"),
                vmem_limit_bytes=vmem_limit,
            ),
        )(seed_arr, x, w1, w2, g1, be1, g2, be2)

    try:
        return _call(single_buffer_x=True)
    except Exception:
        # pl.Buffered(1) / pipeline_mode not supported on this jax build — fall back to
        # default double buffering (correct, just uses a little more VMEM for x).
        return _call(single_buffer_x=False)


def init_params(key, num_neurons, kaiming=False):
    k1, k2, k3, k4 = jax.random.split(key, 4)
    f = num_neurons
    if kaiming:
        std = (2.0 / f) ** 0.5                         # kaiming_normal_, fan_in
        w1 = std * jax.random.normal(k1, (f, f), jnp.float32)
        w2 = std * jax.random.normal(k2, (f, f), jnp.float32)
    else:
        bound = 1.0 / (f ** 0.5)                       # default nn.Linear init range
        w1 = jax.random.uniform(k1, (f, f), jnp.float32, -bound, bound)
        w2 = jax.random.uniform(k2, (f, f), jnp.float32, -bound, bound)
    bound = 1.0 / (f ** 0.5)
    b1 = jax.random.uniform(k3, (f,), jnp.float32, -bound, bound)
    b2 = jax.random.uniform(k4, (f,), jnp.float32, -bound, bound)
    return {
        # Weights stored pre-transposed as (F_in, F_out): y = x @ w_t.
        # (From a PyTorch nn.Linear, pass `linear.weight.T` here once, at load time.)
        "w1_t": w1, "b1": b1,
        "gamma1": jnp.ones((f,), jnp.float32), "beta1": jnp.zeros((f,), jnp.float32),
        "w2_t": w2, "b2": b2,
        "gamma2": jnp.ones((f,), jnp.float32), "beta2": jnp.zeros((f,), jnp.float32),
    }


def _reference_forward(x, params, *, leaky=False, eps=1e-5, mm_dtype=jnp.float32):
    """Pure-JAX reference (training-mode BN, dropout disabled). Applies the Linear biases.

    mm_dtype mimics the kernel's weight / hidden-activation dtype (accumulation stays f32).
    """
    hi = lax.Precision.HIGHEST
    mm = jnp.dtype(mm_dtype)

    def bn(y, g, b):
        m = jnp.mean(y, axis=0)
        v = jnp.mean((y - m) ** 2, axis=0)
        return (y - m) / jnp.sqrt(v + eps) * g + b

    def act(y):
        return jnp.where(y > 0, y, 0.01 * y) if leaky else jnp.maximum(y, 0.0)

    w1 = params["w1_t"].astype(mm)
    w2 = params["w2_t"].astype(mm)
    y = jnp.dot(x.astype(mm), w1, precision=hi,
                preferred_element_type=jnp.float32) + params["b1"]
    y = act(bn(y, params["gamma1"], params["beta1"]))
    y = jnp.dot(y.astype(mm), w2, precision=hi,
                preferred_element_type=jnp.float32) + params["b2"]
    y = act(bn(y, params["gamma2"], params["beta2"]))
    return x + y


if __name__ == "__main__":
    num_neurons = 128
    batch = 64

    key = jax.random.PRNGKey(0)
    kx, kp = jax.random.split(key)
    x = jax.random.normal(kx, (batch, num_neurons), jnp.float32)
    params = init_params(kp, num_neurons, kaiming=False)

    # 1) strict f32 path (dropout off) vs. pure-JAX f32 reference — also demonstrates that
    #    the Linear biases (applied by the reference, dropped by the kernel) cancel exactly.
    out_f32 = jax.block_until_ready(
        residual_block(x, params, seed=0, p_dropout=0.0, leaky=False,
                       matmul_dtype=jnp.float32))
    ref_f32 = _reference_forward(x, params, leaky=False, mm_dtype=jnp.float32)
    assert out_f32.shape == (batch, num_neurons)
    assert bool(jnp.allclose(out_f32, ref_f32, atol=2e-3, rtol=2e-3)), \
        float(jnp.max(jnp.abs(out_f32 - ref_f32)))

    # 2) default bf16 weight/hidden path (dropout off) vs. a bf16-matched reference.
    out_bf16 = jax.block_until_ready(
        residual_block(x, params, seed=0, p_dropout=0.0, leaky=False))
    ref_bf16 = _reference_forward(x, params, leaky=False, mm_dtype=jnp.bfloat16)
    assert out_bf16.shape == (batch, num_neurons)
    assert bool(jnp.allclose(out_bf16, ref_bf16, atol=5e-3, rtol=5e-3)), \
        float(jnp.max(jnp.abs(out_bf16 - ref_bf16)))

    # 3) training path with dropout (in-kernel counter-hash PRNG), default bf16 weights.
    out_drop = jax.block_until_ready(
        residual_block(x, params, seed=1234, p_dropout=0.5, leaky=False))
    assert out_drop.shape == (batch, num_neurons)
    assert bool(jnp.all(jnp.isfinite(out_drop)))
    assert not bool(jnp.allclose(out_drop, out_bf16))   # dropout actually perturbed the output

    print("KERNEL_OK")
</pallas_src>

<mosaic_0001>
module attributes {stable_mosaic.version = 11 : i64} {
  func.func @_residual_block_kernel(%arg0: i32, %arg1: i32, %arg2: memref<1xi32, #tpu.memory_space<smem>>, %arg3: memref<64x128xf32, #tpu.memory_space<vmem>>, %arg4: memref<128x128xf32, #tpu.memory_space<vmem>>, %arg5: memref<128x128xf32, #tpu.memory_space<vmem>>, %arg6: memref<1x128xf32, #tpu.memory_space<vmem>>, %arg7: memref<1x128xf32, #tpu.memory_space<vmem>>, %arg8: memref<1x128xf32, #tpu.memory_space<vmem>>, %arg9: memref<1x128xf32, #tpu.memory_space<vmem>>, %arg10: memref<64x128xf32, #tpu.memory_space<vmem>>, %arg11: memref<64x128xf32, #tpu.memory_space<vmem>>) attributes {dimension_semantics = [#tpu.dimension_semantics<arbitrary>, #tpu.dimension_semantics<arbitrary>], iteration_bounds = array<i64: 2, 1>, scalar_prefetch = 1 : i64, scratch_operands = 1 : i64, tpu.core_type = #tpu.core_type<tc>, window_params = [{pipeline_mode = #tpu.pipeline_mode<synchronous>, transform_indices = @transform_0, window_bounds = array<i64: 64, 128>}, {transform_indices = @transform_1, window_bounds = array<i64: 128, 128>}, {transform_indices = @transform_2, window_bounds = array<i64: 128, 128>}, {transform_indices = @transform_3, window_bounds = array<i64: 1, 128>}, {transform_indices = @transform_4, window_bounds = array<i64: 1, 128>}, {transform_indices = @transform_5, window_bounds = array<i64: 1, 128>}, {transform_indices = @transform_6, window_bounds = array<i64: 1, 128>}, {transform_indices = @transform_7, window_bounds = array<i64: 64, 128>}]} {
    %c128_i32 = arith.constant 128 : i32
    %0 = arith.muli %arg1, %c128_i32 : i32
    %1 = tpu.assume_multiple %0, 128 : i32
    %c0_i32 = arith.constant 0 : i32
    %2 = arith.cmpi eq, %arg0, %c0_i32 : i32
    %3 = arith.extui %2 : i1 to i32
    %c0_i32_0 = arith.constant 0 : i32
    %4 = arith.cmpi ne, %3, %c0_i32_0 : i32
    scf.if %4 {
      %c0 = arith.constant 0 : index
      %c0_2 = arith.constant 0 : index
      %8 = vector.load %arg3[%c0, %c0_2] : memref<64x128xf32, #tpu.memory_space<vmem>>, vector<64x128xf32>
      %c0_3 = arith.constant 0 : index
      %c0_4 = arith.constant 0 : index
      %9 = vector.load %arg4[%c0_3, %c0_4] : memref<128x128xf32, #tpu.memory_space<vmem>>, vector<128x128xf32>
      %cst = arith.constant dense<0.000000e+00> : vector<64x128xf32>
      %10 = tpu.matmul %8, %9, %cst {dimension_numbers = #tpu.dot_dimension_numbers<[1], [0], [0], [1], [0, 0, 1, 1], [], []>} : vector<64x128xf32>, vector<128x128xf32>, vector<64x128xf32> -> vector<64x128xf32>
      %c0_5 = arith.constant 0 : index
      %c0_6 = arith.constant 0 : index
      %11 = vector.load %arg6[%c0_5, %c0_6] : memref<1x128xf32, #tpu.memory_space<vmem>>, vector<1x128xf32>
      %c0_7 = arith.constant 0 : index
      %c0_8 = arith.constant 0 : index
      %12 = vector.load %arg7[%c0_7, %c0_8] : memref<1x128xf32, #tpu.memory_space<vmem>>, vector<1x128xf32>
      %cst_9 = arith.constant dense<0.000000e+00> : vector<128xf32>
      %13 = vector.multi_reduction <add>, %10, %cst_9 [0] : vector<64x128xf32> to vector<128xf32>
      %14 = vector.shape_cast %13 : vector<128xf32> to vector<1x128xf32>
      %cst_10 = arith.constant 6.400000e+01 : f32
      %15 = vector.broadcast %cst_10 : f32 to vector<1x128xf32>
      %16 = arith.divf %14, %15 : vector<1x128xf32>
      %17 = vector.broadcast %16 : vector<1x128xf32> to vector<64x128xf32>
      %18 = arith.subf %10, %17 : vector<64x128xf32>
      %19 = arith.mulf %18, %18 : vector<64x128xf32>
      %cst_11 = arith.constant dense<0.000000e+00> : vector<128xf32>
      %20 = vector.multi_reduction <add>, %19, %cst_11 [0] : vector<64x128xf32> to vector<128xf32>
      %21 = vector.shape_cast %20 : vector<128xf32> to vector<1x128xf32>
      %cst_12 = arith.constant 6.400000e+01 : f32
      %22 = vector.broadcast %cst_12 : f32 to vector<1x128xf32>
      %23 = arith.divf %21, %22 : vector<1x128xf32>
      %cst_13 = arith.constant 9.99999974E-6 : f32
      %24 = vector.broadcast %cst_13 : f32 to vector<1x128xf32>
      %25 = arith.addf %23, %24 : vector<1x128xf32>
      %26 = math.rsqrt %25 : vector<1x128xf32>
      %27 = arith.mulf %11, %26 : vector<1x128xf32>
      %28 = arith.mulf %16, %27 : vector<1x128xf32>
      %29 = arith.subf %12, %28 : vector<1x128xf32>
      %30 = vector.broadcast %27 : vector<1x128xf32> to vector<64x128xf32>
      %31 = arith.mulf %10, %30 : vector<64x128xf32>
      %32 = vector.broadcast %29 : vector<1x128xf32> to vector<64x128xf32>
      %33 = arith.addf %31, %32 : vector<64x128xf32>
      %cst_14 = arith.constant 0.000000e+00 : f32
      %34 = vector.broadcast %cst_14 : f32 to vector<64x128xf32>
      %35 = arith.maximumf %33, %34 : vector<64x128xf32>
      %c0_15 = arith.constant 0 : index
      %36 = arith.index_cast %1 : i32 to index
      %37 = vector.load %arg11[%c0_15, %36] : memref<64x128xf32, #tpu.memory_space<vmem>>, vector<64x128xf32>
      tpu.vector_store %arg11[%c0_15, %36], %35 {strides = array<i32>} : memref<64x128xf32, #tpu.memory_space<vmem>>, vector<64x128xf32>,
    } else {
    }
    %c1_i32 = arith.constant 1 : i32
    %5 = arith.cmpi eq, %arg0, %c1_i32 : i32
    %6 = arith.extui %5 : i1 to i32
    %c0_i32_1 = arith.constant 0 : i32
    %7 = arith.cmpi ne, %6, %c0_i32_1 : i32
    scf.if %7 {
      %c0 = arith.constant 0 : index
      %c0_2 = arith.constant 0 : index
      %8 = vector.load %arg11[%c0, %c0_2] : memref<64x128xf32, #tpu.memory_space<vmem>>, vector<64x128xf32>
      %c0_3 = arith.constant 0 : index
      %c0_4 = arith.constant 0 : index
      %9 = vector.load %arg5[%c0_3, %c0_4] : memref<128x128xf32, #tpu.memory_space<vmem>>, vector<128x128xf32>
      %cst = arith.constant dense<0.000000e+00> : vector<64x128xf32>
      %10 = tpu.matmul %8, %9, %cst {dimension_numbers = #tpu.dot_dimension_numbers<[1], [0], [0], [1], [0, 0, 1, 1], [], []>} : vector<64x128xf32>, vector<128x128xf32>, vector<64x128xf32> -> vector<64x128xf32>
      %c0_5 = arith.constant 0 : index
      %c0_6 = arith.constant 0 : index
      %11 = vector.load %arg8[%c0_5, %c0_6] : memref<1x128xf32, #tpu.memory_space<vmem>>, vector<1x128xf32>
      %c0_7 = arith.constant 0 : index
      %c0_8 = arith.constant 0 : index
      %12 = vector.load %arg9[%c0_7, %c0_8] : memref<1x128xf32, #tpu.memory_space<vmem>>, vector<1x128xf32>
      %cst_9 = arith.constant dense<0.000000e+00> : vector<128xf32>
      %13 = vector.multi_reduction <add>, %10, %cst_9 [0] : vector<64x128xf32> to vector<128xf32>
      %14 = vector.shape_cast %13 : vector<128xf32> to vector<1x128xf32>
      %cst_10 = arith.constant 6.400000e+01 : f32
      %15 = vector.broadcast %cst_10 : f32 to vector<1x128xf32>
      %16 = arith.divf %14, %15 : vector<1x128xf32>
      %17 = vector.broadcast %16 : vector<1x128xf32> to vector<64x128xf32>
      %18 = arith.subf %10, %17 : vector<64x128xf32>
      %19 = arith.mulf %18, %18 : vector<64x128xf32>
      %cst_11 = arith.constant dense<0.000000e+00> : vector<128xf32>
      %20 = vector.multi_reduction <add>, %19, %cst_11 [0] : vector<64x128xf32> to vector<128xf32>
      %21 = vector.shape_cast %20 : vector<128xf32> to vector<1x128xf32>
      %cst_12 = arith.constant 6.400000e+01 : f32
      %22 = vector.broadcast %cst_12 : f32 to vector<1x128xf32>
      %23 = arith.divf %21, %22 : vector<1x128xf32>
      %cst_13 = arith.constant 9.99999974E-6 : f32
      %24 = vector.broadcast %cst_13 : f32 to vector<1x128xf32>
      %25 = arith.addf %23, %24 : vector<1x128xf32>
      %26 = math.rsqrt %25 : vector<1x128xf32>
      %27 = arith.mulf %11, %26 : vector<1x128xf32>
      %28 = arith.mulf %16, %27 : vector<1x128xf32>
      %29 = arith.subf %12, %28 : vector<1x128xf32>
      %30 = vector.broadcast %27 : vector<1x128xf32> to vector<64x128xf32>
      %31 = arith.mulf %10, %30 : vector<64x128xf32>
      %32 = vector.broadcast %29 : vector<1x128xf32> to vector<64x128xf32>
      %33 = arith.addf %31, %32 : vector<64x128xf32>
      %cst_14 = arith.constant 0.000000e+00 : f32
      %34 = vector.broadcast %cst_14 : f32 to vector<64x128xf32>
      %35 = arith.maximumf %33, %34 : vector<64x128xf32>
      %c0_15 = arith.constant 0 : index
      %36 = arith.index_cast %1 : i32 to index
      %37 = vector.load %arg3[%c0_15, %36] : memref<64x128xf32, #tpu.memory_space<vmem>>, vector<64x128xf32>
      %38 = arith.addf %37, %35 : vector<64x128xf32>
      %c0_16 = arith.constant 0 : index
      %c0_17 = arith.constant 0 : index
      %39 = vector.load %arg10[%c0_16, %c0_17] : memref<64x128xf32, #tpu.memory_space<vmem>>, vector<64x128xf32>
      tpu.vector_store %arg10[%c0_16, %c0_17], %38 {strides = array<i32>} : memref<64x128xf32, #tpu.memory_space<vmem>>, vector<64x128xf32>,
    } else {
    }
    return
  }
  func.func @transform_0(%arg0: i32, %arg1: i32, %arg2: memref<1xi32, #tpu.memory_space<smem>>) -> (i32, i32) {
    %c0_i32 = arith.constant 0 : i32
    %c0_i32_0 = arith.constant 0 : i32
    %c0_i32_1 = arith.constant 0 : i32
    return %c0_i32, %c0_i32_0 : i32, i32
  }
  func.func @transform_1(%arg0: i32, %arg1: i32, %arg2: memref<1xi32, #tpu.memory_space<smem>>) -> (i32, i32) {
    %c1_i32 = arith.constant 1 : i32
    %0 = arith.subi %c1_i32, %arg0 : i32
    %1 = arith.muli %arg1, %0 : i32
    %c0_i32 = arith.constant 0 : i32
    %2 = arith.muli %c0_i32, %arg0 : i32
    %3 = arith.addi %1, %2 : i32
    %c0_i32_0 = arith.constant 0 : i32
    %c0_i32_1 = arith.constant 0 : i32
    return %c0_i32_0, %3 : i32, i32
  }
  func.func @transform_2(%arg0: i32, %arg1: i32, %arg2: memref<1xi32, #tpu.memory_space<smem>>) -> (i32, i32) {
    %0 = arith.muli %arg1, %arg0 : i32
    %c0_i32 = arith.constant 0 : i32
    %c0_i32_0 = arith.constant 0 : i32
    return %c0_i32, %0 : i32, i32
  }
  func.func @transform_3(%arg0: i32, %arg1: i32, %arg2: memref<1xi32, #tpu.memory_space<smem>>) -> (i32, i32) {
    %c0_i32 = arith.constant 0 : i32
    %c0_i32_0 = arith.constant 0 : i32
    return %c0_i32, %arg1 : i32, i32
  }
  func.func @transform_4(%arg0: i32, %arg1: i32, %arg2: memref<1xi32, #tpu.memory_space<smem>>) -> (i32, i32) {
    %c0_i32 = arith.constant 0 : i32
    %c0_i32_0 = arith.constant 0 : i32
    return %c0_i32, %arg1 : i32, i32
  }
  func.func @transform_5(%arg0: i32, %arg1: i32, %arg2: memref<1xi32, #tpu.memory_space<smem>>) -> (i32, i32) {
    %c0_i32 = arith.constant 0 : i32
    %c0_i32_0 = arith.constant 0 : i32
    return %c0_i32, %arg1 : i32, i32
  }
  func.func @transform_6(%arg0: i32, %arg1: i32, %arg2: memref<1xi32, #tpu.memory_space<smem>>) -> (i32, i32) {
    %c0_i32 = arith.constant 0 : i32
    %c0_i32_0 = arith.constant 0 : i32
    return %c0_i32, %arg1 : i32, i32
  }
  func.func @transform_7(%arg0: i32, %arg1: i32, %arg2: memref<1xi32, #tpu.memory_space<smem>>) -> (i32, i32) {
    %0 = arith.muli %arg1, %arg0 : i32
    %c0_i32 = arith.constant 0 : i32
    %c0_i32_0 = arith.constant 0 : i32
    return %c0_i32, %0 : i32, i32
  }
}

module attributes {stable_mosaic.version = 11 : i64} {
  func.func @_residual_block_kernel(%arg0: i32, %arg1: i32, %arg2: memref<1xi32, #tpu.memory_space<smem>>, %arg3: memref<64x128xf32, #tpu.memory_space<vmem>>, %arg4: memref<128x128xf32, #tpu.memory_space<vmem>>, %arg5: memref<128x128xf32, #tpu.memory_space<vmem>>, %arg6: memref<1x128xf32, #tpu.memory_space<vmem>>, %arg7: memref<1x128xf32, #tpu.memory_space<vmem>>, %arg8: memref<1x128xf32, #tpu.memory_space<vmem>>, %arg9: memref<1x128xf32, #tpu.memory_space<vmem>>, %arg10: memref<64x128xf32, #tpu.memory_space<vmem>>, %arg11: memref<64x128xf32, #tpu.memory_space<vmem>>) attributes {dimension_semantics = [#tpu.dimension_semantics<arbitrary>, #tpu.dimension_semantics<arbitrary>], iteration_bounds = array<i64: 2, 1>, scalar_prefetch = 1 : i64, scratch_operands = 1 : i64, tpu.core_type = #tpu.core_type<tc>, window_params = [{pipeline_mode = #tpu.pipeline_mode<synchronous>, transform_indices = @transform_0, window_bounds = array<i64: 64, 128>}, {transform_indices = @transform_1, window_bounds = array<i64: 128, 128>}, {transform_indices = @transform_2, window_bounds = array<i64: 128, 128>}, {transform_indices = @transform_3, window_bounds = array<i64: 1, 128>}, {transform_indices = @transform_4, window_bounds = array<i64: 1, 128>}, {transform_indices = @transform_5, window_bounds = array<i64: 1, 128>}, {transform_indices = @transform_6, window_bounds = array<i64: 1, 128>}, {transform_indices = @transform_7, window_bounds = array<i64: 64, 128>}]} {
    %c128_i32 = arith.constant 128 : i32
    %0 = arith.muli %arg1, %c128_i32 : i32
    %1 = tpu.assume_multiple %0, 128 : i32
    %c0_i32 = arith.constant 0 : i32
    %2 = arith.cmpi eq, %arg0, %c0_i32 : i32
    %3 = arith.extui %2 : i1 to i32
    %c0_i32_0 = arith.constant 0 : i32
    %4 = arith.cmpi ne, %3, %c0_i32_0 : i32
    scf.if %4 {
      %c0 = arith.constant 0 : index
      %c0_2 = arith.constant 0 : index
      %8 = vector.load %arg3[%c0, %c0_2] : memref<64x128xf32, #tpu.memory_space<vmem>>, vector<64x128xf32>
      %c0_3 = arith.constant 0 : index
      %c0_4 = arith.constant 0 : index
      %9 = vector.load %arg4[%c0_3, %c0_4] : memref<128x128xf32, #tpu.memory_space<vmem>>, vector<128x128xf32>
      %cst = arith.constant dense<0.000000e+00> : vector<64x128xf32>
      %10 = tpu.matmul %8, %9, %cst {dimension_numbers = #tpu.dot_dimension_numbers<[1], [0], [0], [1], [0, 0, 1, 1], [], []>} : vector<64x128xf32>, vector<128x128xf32>, vector<64x128xf32> -> vector<64x128xf32>
      %c0_5 = arith.constant 0 : index
      %c0_6 = arith.constant 0 : index
      %11 = vector.load %arg6[%c0_5, %c0_6] : memref<1x128xf32, #tpu.memory_space<vmem>>, vector<1x128xf32>
      %c0_7 = arith.constant 0 : index
      %c0_8 = arith.constant 0 : index
      %12 = vector.load %arg7[%c0_7, %c0_8] : memref<1x128xf32, #tpu.memory_space<vmem>>, vector<1x128xf32>
      %cst_9 = arith.constant dense<0.000000e+00> : vector<128xf32>
      %13 = vector.multi_reduction <add>, %10, %cst_9 [0] : vector<64x128xf32> to vector<128xf32>
      %14 = vector.shape_cast %13 : vector<128xf32> to vector<1x128xf32>
      %cst_10 = arith.constant 6.400000e+01 : f32
      %15 = vector.broadcast %cst_10 : f32 to vector<1x128xf32>
      %16 = arith.divf %14, %15 : vector<1x128xf32>
      %17 = vector.broadcast %16 : vector<1x128xf32> to vector<64x128xf32>
      %18 = arith.subf %10, %17 : vector<64x128xf32>
      %19 = arith.mulf %18, %18 : vector<64x128xf32>
      %cst_11 = arith.constant dense<0.000000e+00> : vector<128xf32>
      %20 = vector.multi_reduction <add>, %19, %cst_11 [0] : vector<64x128xf32> to vector<128xf32>
      %21 = vector.shape_cast %20 : vector<128xf32> to vector<1x128xf32>
      %cst_12 = arith.constant 6.400000e+01 : f32
      %22 = vector.broadcast %cst_12 : f32 to vector<1x128xf32>
      %23 = arith.divf %21, %22 : vector<1x128xf32>
      %cst_13 = arith.constant 9.99999974E-6 : f32
      %24 = vector.broadcast %cst_13 : f32 to vector<1x128xf32>
      %25 = arith.addf %23, %24 : vector<1x128xf32>
      %26 = math.rsqrt %25 : vector<1x128xf32>
      %27 = arith.mulf %11, %26 : vector<1x128xf32>
      %28 = arith.mulf %16, %27 : vector<1x128xf32>
      %29 = arith.subf %12, %28 : vector<1x128xf32>
      %30 = vector.broadcast %27 : vector<1x128xf32> to vector<64x128xf32>
      %31 = arith.mulf %10, %30 : vector<64x128xf32>
      %32 = vector.broadcast %29 : vector<1x128xf32> to vector<64x128xf32>
      %33 = arith.addf %31, %32 : vector<64x128xf32>
      %cst_14 = arith.constant 0.000000e+00 : f32
      %34 = vector.broadcast %cst_14 : f32 to vector<64x128xf32>
      %35 = arith.maximumf %33, %34 : vector<64x128xf32>
      %c0_15 = arith.constant 0 : index
      %36 = arith.index_cast %1 : i32 to index
      %37 = vector.load %arg11[%c0_15, %36] : memref<64x128xf32, #tpu.memory_space<vmem>>, vector<64x128xf32>
      tpu.vector_store %arg11[%c0_15, %36], %35 {strides = array<i32>} : memref<64x128xf32, #tpu.memory_space<vmem>>, vector<64x128xf32>,
    } else {
    }
    %c1_i32 = arith.constant 1 : i32
    %5 = arith.cmpi eq, %arg0, %c1_i32 : i32
    %6 = arith.extui %5 : i1 to i32
    %c0_i32_1 = arith.constant 0 : i32
    %7 = arith.cmpi ne, %6, %c0_i32_1 : i32
    scf.if %7 {
      %c0 = arith.constant 0 : index
      %c0_2 = arith.constant 0 : index
      %8 = vector.load %arg11[%c0, %c0_2] : memref<64x128xf32, #tpu.memory_space<vmem>>, vector<64x128xf32>
      %c0_3 = arith.constant 0 : index
      %c0_4 = arith.constant 0 : index
      %9 = vector.load %arg5[%c0_3, %c0_4] : memref<128x128xf32, #tpu.memory_space<vmem>>, vector<128x128xf32>
      %cst = arith.constant dense<0.000000e+00> : vector<64x128xf32>
      %10 = tpu.matmul %8, %9, %cst {dimension_numbers = #tpu.dot_dimension_numbers<[1], [0], [0], [1], [0, 0, 1, 1], [], []>} : vector<64x128xf32>, vector<128x128xf32>, vector<64x128xf32> -> vector<64x128xf32>
      %c0_5 = arith.constant 0 : index
      %c0_6 = arith.constant 0 : index
      %11 = vector.load %arg8[%c0_5, %c0_6] : memref<1x128xf32, #tpu.memory_space<vmem>>, vector<1x128xf32>
      %c0_7 = arith.constant 0 : index
      %c0_8 = arith.constant 0 : index
      %12 = vector.load %arg9[%c0_7, %c0_8] : memref<1x128xf32, #tpu.memory_space<vmem>>, vector<1x128xf32>
      %cst_9 = arith.constant dense<0.000000e+00> : vector<128xf32>
      %13 = vector.multi_reduction <add>, %10, %cst_9 [0] : vector<64x128xf32> to vector<128xf32>
      %14 = vector.shape_cast %13 : vector<128xf32> to vector<1x128xf32>
      %cst_10 = arith.constant 6.400000e+01 : f32
      %15 = vector.broadcast %cst_10 : f32 to vector<1x128xf32>
      %16 = arith.divf %14, %15 : vector<1x128xf32>
      %17 = vector.broadcast %16 : vector<1x128xf32> to vector<64x128xf32>
      %18 = arith.subf %10, %17 : vector<64x128xf32>
      %19 = arith.mulf %18, %18 : vector<64x128xf32>
      %cst_11 = arith.constant dense<0.000000e+00> : vector<128xf32>
      %20 = vector.multi_reduction <add>, %19, %cst_11 [0] : vector<64x128xf32> to vector<128xf32>
      %21 = vector.shape_cast %20 : vector<128xf32> to vector<1x128xf32>
      %cst_12 = arith.constant 6.400000e+01 : f32
      %22 = vector.broadcast %cst_12 : f32 to vector<1x128xf32>
      %23 = arith.divf %21, %22 : vector<1x128xf32>
      %cst_13 = arith.constant 9.99999974E-6 : f32
      %24 = vector.broadcast %cst_13 : f32 to vector<1x128xf32>
      %25 = arith.addf %23, %24 : vector<1x128xf32>
      %26 = math.rsqrt %25 : vector<1x128xf32>
      %27 = arith.mulf %11, %26 : vector<1x128xf32>
      %28 = arith.mulf %16, %27 : vector<1x128xf32>
      %29 = arith.subf %12, %28 : vector<1x128xf32>
      %30 = vector.broadcast %27 : vector<1x128xf32> to vector<64x128xf32>
      %31 = arith.mulf %10, %30 : vector<64x128xf32>
      %32 = vector.broadcast %29 : vector<1x128xf32> to vector<64x128xf32>
      %33 = arith.addf %31, %32 : vector<64x128xf32>
      %cst_14 = arith.constant 0.000000e+00 : f32
      %34 = vector.broadcast %cst_14 : f32 to vector<64x128xf32>
      %35 = arith.maximumf %33, %34 : vector<64x128xf32>
      %c0_15 = arith.constant 0 : index
      %36 = arith.index_cast %1 : i32 to index
      %37 = vector.load %arg3[%c0_15, %36] : memref<64x128xf32, #tpu.memory_space<vmem>>, vector<64x128xf32>
      %38 = arith.addf %37, %35 : vector<64x128xf32>
      %c0_16 = arith.constant 0 : index
      %c0_17 = arith.constant 0 : index
      %39 = vector.load %arg10[%c0_16, %c0_17] : memref<64x128xf32, #tpu.memory_space<vmem>>, vector<64x128xf32>
      tpu.vector_store %arg10[%c0_16, %c0_17], %38 {strides = array<i32>} : memref<64x128xf32, #tpu.memory_space<vmem>>, vector<64x128xf32>,
    } else {
    }
    return
  }
  func.func @transform_0(%arg0: i32, %arg1: i32, %arg2: memref<1xi32, #tpu.memory_space<smem>>) -> (i32, i32) {
    %c0_i32 = arith.constant 0 : i32
    %c0_i32_0 = arith.constant 0 : i32
    %c0_i32_1 = arith.constant 0 : i32
    return %c0_i32, %c0_i32_0 : i32, i32
  }
  func.func @transform_1(%arg0: i32, %arg1: i32, %arg2: memref<1xi32, #tpu.memory_space<smem>>) -> (i32, i32) {
    %c1_i32 = arith.constant 1 : i32
    %0 = arith.subi %c1_i32, %arg0 : i32
    %1 = arith.muli %arg1, %0 : i32
    %c0_i32 = arith.constant 0 : i32
    %2 = arith.muli %c0_i32, %arg0 : i32
    %3 = arith.addi %1, %2 : i32
    %c0_i32_0 = arith.constant 0 : i32
    %c0_i32_1 = arith.constant 0 : i32
    return %c0_i32_0, %3 : i32, i32
  }
  func.func @transform_2(%arg0: i32, %arg1: i32, %arg2: memref<1xi32, #tpu.memory_space<smem>>) -> (i32, i32) {
    %0 = arith.muli %arg1, %arg0 : i32
    %c0_i32 = arith.constant 0 : i32
    %c0_i32_0 = arith.constant 0 : i32
    return %c0_i32, %0 : i32, i32
  }
  func.func @transform_3(%arg0: i32, %arg1: i32, %arg2: memref<1xi32, #tpu.memory_space<smem>>) -> (i32, i32) {
    %c0_i32 = arith.constant 0 : i32
    %c0_i32_0 = arith.constant 0 : i32
    return %c0_i32, %arg1 : i32, i32
  }
  func.func @transform_4(%arg0: i32, %arg1: i32, %arg2: memref<1xi32, #tpu.memory_space<smem>>) -> (i32, i32) {
    %c0_i32 = arith.constant 0 : i32
    %c0_i32_0 = arith.constant 0 : i32
    return %c0_i32, %arg1 : i32, i32
  }
  func.func @transform_5(%arg0: i32, %arg1: i32, %arg2: memref<1xi32, #tpu.memory_space<smem>>) -> (i32, i32) {
    %c0_i32 = arith.constant 0 : i32
    %c0_i32_0 = arith.constant 0 : i32
    return %c0_i32, %arg1 : i32, i32
  }
  func.func @transform_6(%arg0: i32, %arg1: i32, %arg2: memref<1xi32, #tpu.memory_space<smem>>) -> (i32, i32) {
    %c0_i32 = arith.constant 0 : i32
    %c0_i32_0 = arith.constant 0 : i32
    return %c0_i32, %arg1 : i32, i32
  }
  func.func @transform_7(%arg0: i32, %arg1: i32, %arg2: memref<1xi32, #tpu.memory_space<smem>>) -> (i32, i32) {
    %0 = arith.muli %arg1, %arg0 : i32
    %c0_i32 = arith.constant 0 : i32
    %c0_i32_0 = arith.constant 0 : i32
    return %c0_i32, %0 : i32, i32
  }
}

</mosaic_0001>

<llo_original>
// kernel: tpu_custom_call.1
$region0: #{tpu_custom_call.1}
  #allocation0 [shape = 'u32[]', space=smem, size = 0x4, offset = 0x4, fixed_abs, tag = 'smem constant byte address 0x4 - core index']
  #allocation1 [shape = 'u32[144,128]{1,0:T(1,128)}', space=vmem, size = 0x12000, scoped, tag = 'internal scratch']
  #allocation2 [shape = 'f32[64,128]{1,0:T(8,128)}', space=vmem, size = 0x8000, scoped, tag = 'scratch operand']
  #allocation3 [shape = 's32[1]{0}', space=sflag, size = 0x4, scoped, tag = 'scoped memory for tpu_custom_call.1']
  #allocation4 [shape = 's32[1]{0:T(128)S(6)}', space=smem, size = 0x200, scoped, tag = 'prefetched SMEM operand 0']
  %s0 = inlined_call_operand.<no memory space> [shape: s32[1], index: 0, kind: input, shape index: {}]
  %s1 = inlined_call_operand.hbm [shape: f32[64,128], index: 1, kind: input, shape index: {}]
  %s2 = inlined_call_operand.hbm [shape: f32[128,128], index: 2, kind: input, shape index: {}]
  %s3 = inlined_call_operand.hbm [shape: f32[128,128], index: 3, kind: input, shape index: {}]
  %s4 = inlined_call_operand.vmem [shape: f32[1,128], index: 4, kind: input, shape index: {}]
  %s5 = inlined_call_operand.vmem [shape: f32[1,128], index: 5, kind: input, shape index: {}]
  %s6 = inlined_call_operand.vmem [shape: f32[1,128], index: 6, kind: input, shape index: {}]
  %s7 = inlined_call_operand.vmem [shape: f32[1,128], index: 7, kind: input, shape index: {}]
  %s8 = inlined_call_operand.hbm [shape: f32[64,128], index: 8, kind: output, shape index: {}]
  %s9 = sld [smem:[#allocation0]]
  $region81: #{tpu_custom_call.1} parent=0
    _
  %s11 = ssub.s32 1, %s9
  %s12 = scalar_select 0, %s11, %s9
  %13 = sst [smem:[#allocation4]] %s0
  $region1: #{tpu_custom_call.1} parent=0
    #allocation5 [shape = 'u8[32768]{0}', space=vmem, size = 0x8000, scoped, tag = 'input window, operand 1, single buffered']
    #allocation6 [shape = 's32[2]{0}', space=sflag, size = 0x8, scoped, tag = 'scoped memory for tpu_custom_call.1']
    #allocation7 [shape = 's32[2]{0}', space=sflag, size = 0x8, scoped, tag = 'scoped memory for tpu_custom_call.1']
    #allocation8 [shape = 'u8[131072]{0}', space=vmem, size = 0x20000, scoped, tag = 'input window, operand 2']
    #allocation9 [shape = 's32[2]{0}', space=sflag, size = 0x8, scoped, tag = 'scoped memory for tpu_custom_call.1']
    #allocation10 [shape = 'u8[131072]{0}', space=vmem, size = 0x20000, scoped, tag = 'input window, operand 3']
    #allocation11 [shape = 'u8[65536]{0}', space=vmem, size = 0x10000, scoped, tag = 'output window, operand 0']
    %14 = vsyncpa [#allocation6], 0
    %15 = vsyncpa [#allocation9], 0
    %s16 = scalar_lea.sflag [#allocation9], 1
    %17 = vsyncpa %s16, 0
    %18 = vsyncpa [#allocation7], 0
    %s19 = scalar_lea.sflag [#allocation7], 1
    %20 = vsyncpa %s19, 0
    loop: start=0, step=1, limit=4
    $region2: #{tpu_custom_call.1} parent=1 // loop_pre_header
      _
    $region3: #{tpu_custom_call.1} parent=1 // loop_header
      %s22 = sphi 0, %s26
      %p23 = scmp.ge.s32.totalorder %s22, 4
      %s29 = sphi 0, %s41
      %s30 = sphi 0, %s37
      %s31 = sphi 0, %s29
      %s32 = sphi 0, %s30
      %s33 = sphi 0, %s31
      %s34 = sphi 0, %s32
      %s42 = sphi 0, %s42
      %s44 = sphi 0, %s42
      %s45 = sphi 0, %s44
      %s59 = sphi 0, %s45
      %s69 = sphi 0, %s71
      %s72 = sphi 0, %s69
      %s73 = sphi 0, %s72
      %s89 = sphi 0, %s73
      %s97 = sphi 0, %s99
      %s100 = sphi 0, %s97
      %s101 = sphi 0, %s100
      %s117 = sphi 0, %s101
      %s123 = sphi 0, %s125
      %s126 = sphi 0, %s123
      %s127 = sphi 0, %s126
      %s143 = sphi 0, %s127
      %s149 = sphi 0, %s151
      %s152 = sphi 0, %s149
      %s153 = sphi 0, %s152
      %s169 = sphi 0, %s153
      %s175 = sphi 0, %s177
      %s178 = sphi 0, %s175
      %s179 = sphi 0, %s178
      %s195 = sphi 0, %s179
      %s201 = sphi 0, %s203
      %s204 = sphi 0, %s201
      %s205 = sphi 0, %s204
      %s221 = sphi 0, %s205
      %s229 = sphi 0, %s231
      %s232 = sphi 0, %s229
      %s233 = sphi 0, %s232
      %s249 = sphi 0, %s233
    $region4: #{tpu_custom_call.1} parent=1 // loop_header_branch
      %25 = sbr.rel (%p23) target = $region8
    $region5: #{tpu_custom_call.1} parent=1 // loop_body
      %s27 = ssub.s32 %s22, 1
      %s28 = ssub.s32 %s22, 2
      %s35 = sadd.s32 1, %s30
      %p36 = scmp.ge.s32.totalorder %s35, 1
      %s37 = scalar_select %p36, 0, %s35
      %s38 = sadd.s32 1, %s29
      %s39 = scalar_select %p36, %s38, %s29
      %p40 = scmp.ge.s32.totalorder %s39, 2
      %s41 = scalar_select %p40, 0, %s39
      %s43 = sadd.s32 %s42, 1
      %p46 = scmp.eq.s32.totalorder %s22, 1
      %p47 = scmp.ne.s32.totalorder %s42, %s44
      %p48 = scmp.eq.s32.totalorder %s22, 0
      %p49 = por %p47, %p48
      %p50 = scmp.ne.s32.totalorder %s42, %s44
      %p51 = scmp.eq.s32.totalorder %s27, 1
      %p52 = por %p50, %p51
      %p53 = scmp.ne.s32.totalorder %s44, %s45
      %p54 = scmp.eq.s32.totalorder %s27, 0
      %p55 = por %p53, %p54
      %p56 = scmp.ne.s32.totalorder %s44, %s45
      %p57 = scmp.eq.s32.totalorder %s28, 1
      %p58 = por %p56, %p57
      %p60 = scmp.ne.s32.totalorder %s45, %s59
      %p61 = scmp.eq.s32.totalorder %s28, 0
      %p62 = por %p60, %p61
      %s63 = ssub.s32 1, %s29
      %s64 = smul.u32 %s30, %s63
      %s65 = ssub.s32 1, %s41
      %s66 = smul.u32 %s37, %s65
      %s67 = ssub.s32 %s64, %s66
      %p68 = scmp.eq.s32.totalorder %s67, 0
      %s70 = sadd.s32 %s69, 1
      %s71 = scalar_select %p68, %s69, %s70
      %p74 = pneg %p68
      %p75 = scmp.eq.s32.totalorder %s22, 1
      %p76 = por %p74, %p75
      %p77 = scmp.ne.s32.totalorder %s69, %s72
      %p78 = scmp.eq.s32.totalorder %s22, 0
      %p79 = por %p77, %p78
      %p80 = scmp.ne.s32.totalorder %s69, %s72
      %p81 = scmp.eq.s32.totalorder %s27, 1
      %p82 = por %p80, %p81
      %p83 = scmp.ne.s32.totalorder %s72, %s73
      %p84 = scmp.eq.s32.totalorder %s27, 0
      %p85 = por %p83, %p84
      %p86 = scmp.ne.s32.totalorder %s72, %s73
      %p87 = scmp.eq.s32.totalorder %s28, 1
      %p88 = por %p86, %p87
      %p90 = scmp.ne.s32.totalorder %s73, %s89
      %p91 = scmp.eq.s32.totalorder %s28, 0
      %p92 = por %p90, %p91
      %s93 = smul.u32 %s30, %s29
      %s94 = smul.u32 %s37, %s41
      %s95 = ssub.s32 %s93, %s94
      %p96 = scmp.eq.s32.totalorder %s95, 0
      %s98 = sadd.s32 %s97, 1
      %s99 = scalar_select %p96, %s97, %s98
      %p102 = pneg %p96
      %p103 = scmp.eq.s32.totalorder %s22, 1
      %p104 = por %p102, %p103
      %p105 = scmp.ne.s32.totalorder %s97, %s100
      %p106 = scmp.eq.s32.totalorder %s22, 0
      %p107 = por %p105, %p106
      %p108 = scmp.ne.s32.totalorder %s97, %s100
      %p109 = scmp.eq.s32.totalorder %s27, 1
      %p110 = por %p108, %p109
      %p111 = scmp.ne.s32.totalorder %s100, %s101
      %p112 = scmp.eq.s32.totalorder %s27, 0
      %p113 = por %p111, %p112
      %p114 = scmp.ne.s32.totalorder %s100, %s101
      %p115 = scmp.eq.s32.totalorder %s28, 1
      %p116 = por %p114, %p115
      %p118 = scmp.ne.s32.totalorder %s101, %s117
      %p119 = scmp.eq.s32.totalorder %s28, 0
      %p120 = por %p118, %p119
      %s121 = ssub.s32 %s30, %s37
      %p122 = scmp.eq.s32.totalorder %s121, 0
      %s124 = sadd.s32 %s123, 1
      %s125 = scalar_select %p122, %s123, %s124
      %p128 = pneg %p122
      %p129 = scmp.eq.s32.totalorder %s22, 1
      %p130 = por %p128, %p129
      %p131 = scmp.ne.s32.totalorder %s123, %s126
      %p132 = scmp.eq.s32.totalorder %s22, 0
      %p133 = por %p131, %p132
      %p134 = scmp.ne.s32.totalorder %s123, %s126
      %p135 = scmp.eq.s32.totalorder %s27, 1
      %p136 = por %p134, %p135
      %p137 = scmp.ne.s32.totalorder %s126, %s127
      %p138 = scmp.eq.s32.totalorder %s27, 0
      %p139 = por %p137, %p138
      %p140 = scmp.ne.s32.totalorder %s126, %s127
      %p141 = scmp.eq.s32.totalorder %s28, 1
      %p142 = por %p140, %p141
      %p144 = scmp.ne.s32.totalorder %s127, %s143
      %p145 = scmp.eq.s32.totalorder %s28, 0
      %p146 = por %p144, %p145
      %s147 = ssub.s32 %s30, %s37
      %p148 = scmp.eq.s32.totalorder %s147, 0
      %s150 = sadd.s32 %s149, 1
      %s151 = scalar_select %p148, %s149, %s150
      %p154 = pneg %p148
      %p155 = scmp.eq.s32.totalorder %s22, 1
      %p156 = por %p154, %p155
      %p157 = scmp.ne.s32.totalorder %s149, %s152
      %p158 = scmp.eq.s32.totalorder %s22, 0
      %p159 = por %p157, %p158
      %p160 = scmp.ne.s32.totalorder %s149, %s152
      %p161 = scmp.eq.s32.totalorder %s27, 1
      %p162 = por %p160, %p161
      %p163 = scmp.ne.s32.totalorder %s152, %s153
      %p164 = scmp.eq.s32.totalorder %s27, 0
      %p165 = por %p163, %p164
      %p166 = scmp.ne.s32.totalorder %s152, %s153
      %p167 = scmp.eq.s32.totalorder %s28, 1
      %p168 = por %p166, %p167
      %p170 = scmp.ne.s32.totalorder %s153, %s169
      %p171 = scmp.eq.s32.totalorder %s28, 0
      %p172 = por %p170, %p171
      %s173 = ssub.s32 %s30, %s37
      %p174 = scmp.eq.s32.totalorder %s173, 0
      %s176 = sadd.s32 %s175, 1
      %s177 = scalar_select %p174, %s175, %s176
      %p180 = pneg %p174
      %p181 = scmp.eq.s32.totalorder %s22, 1
      %p182 = por %p180, %p181
      %p183 = scmp.ne.s32.totalorder %s175, %s178
      %p184 = scmp.eq.s32.totalorder %s22, 0
      %p185 = por %p183, %p184
      %p186 = scmp.ne.s32.totalorder %s175, %s178
      %p187 = scmp.eq.s32.totalorder %s27, 1
      %p188 = por %p186, %p187
      %p189 = scmp.ne.s32.totalorder %s178, %s179
      %p190 = scmp.eq.s32.totalorder %s27, 0
      %p191 = por %p189, %p190
      %p192 = scmp.ne.s32.totalorder %s178, %s179
      %p193 = scmp.eq.s32.totalorder %s28, 1
      %p194 = por %p192, %p193
      %p196 = scmp.ne.s32.totalorder %s179, %s195
      %p197 = scmp.eq.s32.totalorder %s28, 0
      %p198 = por %p196, %p197
      %s199 = ssub.s32 %s30, %s37
      %p200 = scmp.eq.s32.totalorder %s199, 0
      %s202 = sadd.s32 %s201, 1
      %s203 = scalar_select %p200, %s201, %s202
      %p206 = pneg %p200
      %p207 = scmp.eq.s32.totalorder %s22, 1
      %p208 = por %p206, %p207
      %p209 = scmp.ne.s32.totalorder %s201, %s204
      %p210 = scmp.eq.s32.totalorder %s22, 0
      %p211 = por %p209, %p210
      %p212 = scmp.ne.s32.totalorder %s201, %s204
      %p213 = scmp.eq.s32.totalorder %s27, 1
      %p214 = por %p212, %p213
      %p215 = scmp.ne.s32.totalorder %s204, %s205
      %p216 = scmp.eq.s32.totalorder %s27, 0
      %p217 = por %p215, %p216
      %p218 = scmp.ne.s32.totalorder %s204, %s205
      %p219 = scmp.eq.s32.totalorder %s28, 1
      %p220 = por %p218, %p219
      %p222 = scmp.ne.s32.totalorder %s205, %s221
      %p223 = scmp.eq.s32.totalorder %s28, 0
      %p224 = por %p222, %p223
      %s225 = smul.u32 %s30, %s29
      %s226 = smul.u32 %s37, %s41
      %s227 = ssub.s32 %s225, %s226
      %p228 = scmp.eq.s32.totalorder %s227, 0
      %s230 = sadd.s32 %s229, 1
      %s231 = scalar_select %p228, %s229, %s230
      %p234 = pneg %p228
      %p235 = scmp.eq.s32.totalorder %s22, 1
      %p236 = por %p234, %p235
      %p237 = scmp.ne.s32.totalorder %s229, %s232
      %p238 = scmp.eq.s32.totalorder %s22, 0
      %p239 = por %p237, %p238
      %p240 = scmp.ne.s32.totalorder %s229, %s232
      %p241 = scmp.eq.s32.totalorder %s27, 1
      %p242 = por %p240, %p241
      %p243 = scmp.ne.s32.totalorder %s232, %s233
      %p244 = scmp.eq.s32.totalorder %s27, 0
      %p245 = por %p243, %p244
      %p246 = scmp.ne.s32.totalorder %s232, %s233
      %p247 = scmp.eq.s32.totalorder %s28, 1
      %p248 = por %p246, %p247
      %p250 = scmp.ne.s32.totalorder %s233, %s249
      %p251 = scmp.eq.s32.totalorder %s28, 0
      %p252 = por %p250, %p251
      %p253 = scmp.le.s32.totalorder 1, %s22
      %p254 = scmp.lt.s32.totalorder %s22, 3
      %p255 = pnand %p253, %p254
      %p256 = pneg %p255
      // Predicated region
      $region9: #{tpu_custom_call.1} parent=5 // pred_check
        _
      $region10: #{tpu_custom_call.1} parent=5 // pred_check_branch
        %258 = sbr.rel (%p255) target = $region12
      $region11: #{tpu_custom_call.1} parent=5 // pred_region
        %s259 = ssub.s32 %s22, 1
        // Predicated region
        $region13: #{tpu_custom_call.1} parent=11 // pred_check
          %p260 = pneg %p55
        $region14: #{tpu_custom_call.1} parent=11 // pred_check_branch
          %262 = sbr.rel (%p260) target = $region16
        $region15: #{tpu_custom_call.1} parent=11 // pred_region
          %s264 = ssub.s32 1024, 1024
          %265 = vsyncadd [#allocation6], %s264
          %s266 = sshll.u32 [#allocation5], 4
          %s267 = int_to_ptr.vmem [resolvable:$true] %s266
          %272 = dma.hbm_to_vmem [thread:$0]  %s1, 1024, %s267, [#allocation6], 128, 128, 8
        $region16: #{tpu_custom_call.1} parent=11 // pred_fallthru
          _
        // Predicated region
        $region17: #{tpu_custom_call.1} parent=11 // pred_check
          %p273 = pneg %p139
        $region18: #{tpu_custom_call.1} parent=11 // pred_check_branch
          %275 = sbr.rel (%p273) target = $region20
        $region19: #{tpu_custom_call.1} parent=11 // pred_region
          %p276 = scmp.lt.s32.totalorder %s32, 0
          %s277 = scalar_select %p276, %s32, 0
          %s278 = scalar_lea.vmem %s4, %s277
        $region20: #{tpu_custom_call.1} parent=11 // pred_fallthru
          _
        // Predicated region
        $region21: #{tpu_custom_call.1} parent=11 // pred_check
          %p279 = pneg %p165
        $region22: #{tpu_custom_call.1} parent=11 // pred_check_branch
          %281 = sbr.rel (%p279) target = $region24
        $region23: #{tpu_custom_call.1} parent=11 // pred_region
          %p282 = scmp.lt.s32.totalorder %s32, 0
          %s283 = scalar_select %p282, %s32, 0
          %s284 = scalar_lea.vmem %s5, %s283
        $region24: #{tpu_custom_call.1} parent=11 // pred_fallthru
          _
        // Predicated region
        $region25: #{tpu_custom_call.1} parent=11 // pred_check
          %p285 = pneg %p191
        $region26: #{tpu_custom_call.1} parent=11 // pred_check_branch
          %287 = sbr.rel (%p285) target = $region28
        $region27: #{tpu_custom_call.1} parent=11 // pred_region
          %p288 = scmp.lt.s32.totalorder %s32, 0
          %s289 = scalar_select %p288, %s32, 0
          %s290 = scalar_lea.vmem %s6, %s289
        $region28: #{tpu_custom_call.1} parent=11 // pred_fallthru
          _
        // Predicated region
        $region29: #{tpu_custom_call.1} parent=11 // pred_check
          %p291 = pneg %p217
        $region30: #{tpu_custom_call.1} parent=11 // pred_check_branch
          %293 = sbr.rel (%p291) target = $region32
        $region31: #{tpu_custom_call.1} parent=11 // pred_region
          %p294 = scmp.lt.s32.totalorder %s32, 0
          %s295 = scalar_select %p294, %s32, 0
          %s296 = scalar_lea.vmem %s7, %s295
        $region32: #{tpu_custom_call.1} parent=11 // pred_fallthru
          _
      $region12: #{tpu_custom_call.1} parent=5 // pred_fallthru
        _
      %p297 = scmp.lt.s32.totalorder %s22, 2
      // Predicated region
      $region33: #{tpu_custom_call.1} parent=5 // pred_check
        %p298 = pneg %p297
      $region34: #{tpu_custom_call.1} parent=5 // pred_check_branch
        %300 = sbr.rel (%p298) target = $region36
      $region35: #{tpu_custom_call.1} parent=5 // pred_region
        // Predicated region
        $region37: #{tpu_custom_call.1} parent=35 // pred_check
          %p301 = pneg %p79
        $region38: #{tpu_custom_call.1} parent=35 // pred_check_branch
          %303 = sbr.rel (%p301) target = $region40
        $region39: #{tpu_custom_call.1} parent=35 // pred_region
          %s304 = sand.u32 %s22, 1
          %s305 = scalar_lea.sflag [#allocation9], %s304
          %s306 = sand.u32 %s69, 1
          %s307 = smul.addr %s306, 128
          %s308 = scalar_lea.vmem [#allocation8], %s307
          %s309 = ssub.s32 1, %s29
          %s310 = smul.u32 %s30, %s309
          %s312 = ssub.s32 2048, 2048
          %313 = vsyncadd %s305, %s312
          %s314 = smul.addr %s310, 128
          %s315 = scalar_lea.hbm %s2, %s314
          %s316 = sshll.u32 %s308, 4
          %s317 = int_to_ptr.vmem [resolvable:$true] %s316
          %322 = dma.hbm_to_vmem [thread:$0]  %s315, 2048, %s317, %s305, 128, 128, 8
        $region40: #{tpu_custom_call.1} parent=35 // pred_fallthru
          _
        // Predicated region
        $region41: #{tpu_custom_call.1} parent=35 // pred_check
          %p323 = pneg %p107
        $region42: #{tpu_custom_call.1} parent=35 // pred_check_branch
          %325 = sbr.rel (%p323) target = $region44
        $region43: #{tpu_custom_call.1} parent=35 // pred_region
          %s326 = sand.u32 %s22, 1
          %s327 = scalar_lea.sflag [#allocation9], %s326
          %s328 = sand.u32 %s97, 1
          %s329 = smul.addr %s328, 128
          %s330 = scalar_lea.vmem [#allocation10], %s329
          %s331 = smul.u32 %s30, %s29
          %s333 = ssub.s32 2048, 2048
          %334 = vsyncadd %s327, %s333
          %s335 = smul.addr %s331, 128
          %s336 = scalar_lea.hbm %s3, %s335
          %s337 = sshll.u32 %s330, 4
          %s338 = int_to_ptr.vmem [resolvable:$true] %s337
          %343 = dma.hbm_to_vmem [thread:$0]  %s336, 2048, %s338, %s327, 128, 128, 8
        $region44: #{tpu_custom_call.1} parent=35 // pred_fallthru
          _
      $region36: #{tpu_custom_call.1} parent=5 // pred_fallthru
        _
      %p344 = scmp.le.s32.totalorder 1, %s22
      %p345 = scmp.lt.s32.totalorder %s22, 3
      %p346 = pnand %p344, %p345
      %p347 = pneg %p346
      // Predicated region
      $region45: #{tpu_custom_call.1} parent=5 // pred_check
        _
      $region46: #{tpu_custom_call.1} parent=5 // pred_check_branch
        %349 = sbr.rel (%p346) target = $region48
      $region47: #{tpu_custom_call.1} parent=5 // pred_region
        %s350 = ssub.s32 %s22, 1
        // Predicated region
        $region49: #{tpu_custom_call.1} parent=47 // pred_check
          %p351 = pneg %p55
        $region50: #{tpu_custom_call.1} parent=47 // pred_check_branch
          %353 = sbr.rel (%p351) target = $region52
        $region51: #{tpu_custom_call.1} parent=47 // pred_region
          %354 = dma.done [#allocation6], 1024
        $region52: #{tpu_custom_call.1} parent=47 // pred_fallthru
          _
        %s355 = sand.u32 %s27, 1
        %s356 = scalar_lea.sflag [#allocation9], %s355
        %s357 = sand.u32 %s72, 1
        %s358 = smul.addr %s357, 128
        %s359 = scalar_lea.vmem [#allocation8], %s358
        // Predicated region
        $region53: #{tpu_custom_call.1} parent=47 // pred_check
          %p360 = pneg %p85
        $region54: #{tpu_custom_call.1} parent=47 // pred_check_branch
          %362 = sbr.rel (%p360) target = $region56
        $region55: #{tpu_custom_call.1} parent=47 // pred_region
          %363 = dma.done %s356, 2048
        $region56: #{tpu_custom_call.1} parent=47 // pred_fallthru
          _
        %s364 = sand.u32 %s27, 1
        %s365 = scalar_lea.sflag [#allocation9], %s364
        %s366 = sand.u32 %s100, 1
        %s367 = smul.addr %s366, 128
        %s368 = scalar_lea.vmem [#allocation10], %s367
        // Predicated region
        $region57: #{tpu_custom_call.1} parent=47 // pred_check
          %p369 = pneg %p113
        $region58: #{tpu_custom_call.1} parent=47 // pred_check_branch
          %371 = sbr.rel (%p369) target = $region60
        $region59: #{tpu_custom_call.1} parent=47 // pred_region
          %372 = dma.done %s365, 2048
        $region60: #{tpu_custom_call.1} parent=47 // pred_fallthru
          _
        %p373 = pneg %p55
        %p374 = pneg %p52
        %s375 = sand.u32 %s27, 1
        %s376 = scalar_lea.sflag [#allocation9], %s375
        %s377 = sand.u32 %s72, 1
        %s378 = smul.addr %s377, 128
        %s379 = scalar_lea.vmem [#allocation8], %s378
        %p380 = pneg %p85
        %p381 = pneg %p82
        %s382 = sand.u32 %s27, 1
        %s383 = scalar_lea.sflag [#allocation9], %s382
        %s384 = sand.u32 %s100, 1
        %s385 = smul.addr %s384, 128
        %s386 = scalar_lea.vmem [#allocation10], %s385
        %p387 = pneg %p113
        %p388 = pneg %p110
        %p389 = scmp.lt.s32.totalorder %s32, 0
        %s390 = scalar_select %p389, %s32, 0
        %s391 = scalar_lea.vmem %s4, %s390
        %p392 = pneg %p139
        %p393 = pneg %p136
        %p394 = scmp.lt.s32.totalorder %s32, 0
        %s395 = scalar_select %p394, %s32, 0
        %s396 = scalar_lea.vmem %s5, %s395
        %p397 = pneg %p165
        %p398 = pneg %p162
        %p399 = scmp.lt.s32.totalorder %s32, 0
        %s400 = scalar_select %p399, %s32, 0
        %s401 = scalar_lea.vmem %s6, %s400
        %p402 = pneg %p191
        %p403 = pneg %p188
        %p404 = scmp.lt.s32.totalorder %s32, 0
        %s405 = scalar_select %p404, %s32, 0
        %s406 = scalar_lea.vmem %s7, %s405
        %p407 = pneg %p217
        %p408 = pneg %p214
        %p409 = pneg %p245
        %p410 = pneg %p242
        %s411 = sand.u32 %s232, 1
        %s412 = scalar_lea.sflag [#allocation7], %s411
        %s413 = sand.u32 %s232, 1
        %s414 = smul.addr %s413, 64
        %s415 = scalar_lea.vmem [#allocation11], %s414
        %s416 = ssub.s32 1, %s31
        %s417 = smul.u32 %s32, %s416
        %s418 = smul.u32 %s32, %s31
        %p419 = scmp.lt.s32.totalorder %s32, 0
        %s420 = scalar_select %p419, %s32, 0
        %s421 = scalar_lea.vmem %s4, %s420
        %p422 = scmp.lt.s32.totalorder %s32, 0
        %s423 = scalar_select %p422, %s32, 0
        %s424 = scalar_lea.vmem %s5, %s423
        %p425 = scmp.lt.s32.totalorder %s32, 0
        %s426 = scalar_select %p425, %s32, 0
        %s427 = scalar_lea.vmem %s6, %s426
        %p428 = scmp.lt.s32.totalorder %s32, 0
        %s429 = scalar_select %p428, %s32, 0
        %s430 = scalar_lea.vmem %s7, %s429
        %s431 = smul.u32 %s32, %s31
        %s432 = smul.u32 %s32, 128
        %p433 = scmp.eq.s32.totalorder %s31, 0
        // Predicated region
        $region61: #{tpu_custom_call.1} parent=47 // pred_check
          %p434 = pneg %p433
        $region62: #{tpu_custom_call.1} parent=47 // pred_check_branch
          %436 = sbr.rel (%p434) target = $region64
        $region63: #{tpu_custom_call.1} parent=47 // pred_region
          %v437 = vld [vmem:[#allocation5] sm:$0xff]
          %v438 = vld [vmem:[#allocation5 + $0x8] sm:$0xff]
          %v439 = vld [vmem:[#allocation5 + $0x10] sm:$0xff]
          %v440 = vld [vmem:[#allocation5 + $0x18] sm:$0xff]
          %v441 = vld [vmem:[#allocation5 + $0x20] sm:$0xff]
          %v442 = vld [vmem:[#allocation5 + $0x28] sm:$0xff]
          %v443 = vld [vmem:[#allocation5 + $0x30] sm:$0xff]
          %v444 = vld [vmem:[#allocation5 + $0x38] sm:$0xff]
          %v445 = vld [vmem:[%s359] sm:$0xff]
          %v446 = vld [vmem:[%s359 + $0x8] sm:$0xff]
          %v447 = vld [vmem:[%s359 + $0x10] sm:$0xff]
          %v448 = vld [vmem:[%s359 + $0x18] sm:$0xff]
          %v449 = vld [vmem:[%s359 + $0x20] sm:$0xff]
          %v450 = vld [vmem:[%s359 + $0x28] sm:$0xff]
          %v451 = vld [vmem:[%s359 + $0x30] sm:$0xff]
          %v452 = vld [vmem:[%s359 + $0x38] sm:$0xff]
          %v453 = vld [vmem:[%s359 + $0x40] sm:$0xff]
          %v454 = vld [vmem:[%s359 + $0x48] sm:$0xff]
          %v455 = vld [vmem:[%s359 + $0x50] sm:$0xff]
          %v456 = vld [vmem:[%s359 + $0x58] sm:$0xff]
          %v457 = vld [vmem:[%s359 + $0x60] sm:$0xff]
          %v458 = vld [vmem:[%s359 + $0x68] sm:$0xff]
          %v459 = vld [vmem:[%s359 + $0x70] sm:$0xff]
          %v460 = vld [vmem:[%s359 + $0x78] sm:$0xff]
          %461 = vmatprep.subr.mxu0 0.0
          %462 = vmatpush1.msra.mxu0 %v445
          %463 = vmatprep.subr.mxu0 0.0
          %464 = vmatpush1.msra.mxu0 %v446
          %465 = vmatprep.subr.mxu0 0.0
          %466 = vmatpush1.msra.mxu0 %v447
          %467 = vmatprep.subr.mxu0 0.0
          %468 = vmatpush1.msra.mxu0 %v448
          %469 = vmatprep.subr.mxu0 0.0
          %470 = vmatpush1.msra.mxu0 %v449
          %471 = vmatprep.subr.mxu0 0.0
          %472 = vmatpush1.msra.mxu0 %v450
          %473 = vmatprep.subr.mxu0 0.0
          %474 = vmatpush1.msra.mxu0 %v451
          %475 = vmatprep.subr.mxu0 0.0
          %476 = vmatpush1.msra.mxu0 %v452
          %477 = vmatprep.subr.mxu0 0.0
          %478 = vmatpush1.msra.mxu0 %v453
          %479 = vmatprep.subr.mxu0 0.0
          %480 = vmatpush1.msra.mxu0 %v454
          %481 = vmatprep.subr.mxu0 0.0
          %482 = vmatpush1.msra.mxu0 %v455
          %483 = vmatprep.subr.mxu0 0.0
          %484 = vmatpush1.msra.mxu0 %v456
          %485 = vmatprep.subr.mxu0 0.0
          %486 = vmatpush1.msra.mxu0 %v457
          %487 = vmatprep.subr.mxu0 0.0
          %488 = vmatpush1.msra.mxu0 %v458
          %489 = vmatprep.subr.mxu0 0.0
          %490 = vmatpush1.msra.mxu0 %v459
          %491 = vmatprep.subr.mxu0 0.0
          %492 = vmatpush1.msra.mxu0 %v460
          %493 = vmatprep.subr.mxu0 0.0
          %494 = vmatpush1.msra.mxu0 0.0
          %495 = vmatprep.subr.mxu0 0.0
          %496 = vmatpush1.msra.mxu0 0.0
          %497 = vmatprep.subr.mxu0 0.0
          %498 = vmatpush1.msra.mxu0 0.0
          %499 = vmatprep.subr.mxu0 0.0
          %500 = vmatpush1.msra.mxu0 0.0
          %501 = vmatprep.subr.mxu0 0.0
          %502 = vmatpush1.msra.mxu0 0.0
          %503 = vmatprep.subr.mxu0 0.0
          %504 = vmatpush1.msra.mxu0 0.0
          %505 = vmatprep.subr.mxu0 0.0
          %506 = vmatpush1.msra.mxu0 0.0
          %507 = vmatprep.subr.mxu0 0.0
          %508 = vmatpush1.msra.mxu0 0.0
          %509 = vmatprep.subr.mxu0 0.0
          %510 = vmatpush1.msra.mxu0 0.0
          %511 = vmatprep.subr.mxu0 0.0
          %512 = vmatpush1.msra.mxu0 0.0
          %513 = vmatprep.subr.mxu0 0.0
          %514 = vmatpush1.msra.mxu0 0.0
          %515 = vmatprep.subr.mxu0 0.0
          %516 = vmatpush1.msra.mxu0 0.0
          %517 = vmatprep.subr.mxu0 0.0
          %518 = vmatpush1.msra.mxu0 0.0
          %519 = vmatprep.subr.mxu0 0.0
          %520 = vmatpush1.msra.mxu0 0.0
          %521 = vmatprep.subr.mxu0 0.0
          %522 = vmatpush1.msra.mxu0 0.0
          %523 = vmatprep.subr.mxu0 0.0
          %524 = vmatpush1.msra.mxu0 0.0
          %525 = vmatprep.mubr.f32.mxu0 0.0
          %526 = vmatmul.mubr.f32.gmra.mrb[0].mxu0 %v437
          %v527 = vpop.f32.mrb[0].mxu0
          %v528 = vadd.f32 0.0, %v527
          %v529 = vpop.f32.mrb[0].mxu0
          %530 = vmatprep.mubr.f32.mxu0 0.0
          %531 = vmatmul.mubr.f32.gmra.mrb[0].mxu0 %v438
          %v532 = vpop.f32.mrb[0].mxu0
          %v533 = vadd.f32 0.0, %v532
          %v534 = vpop.f32.mrb[0].mxu0
          %535 = vmatprep.mubr.f32.mxu0 0.0
          %536 = vmatmul.mubr.f32.gmra.mrb[0].mxu0 %v439
          %v537 = vpop.f32.mrb[0].mxu0
          %v538 = vadd.f32 0.0, %v537
          %v539 = vpop.f32.mrb[0].mxu0
          %540 = vmatprep.mubr.f32.mxu0 0.0
          %541 = vmatmul.mubr.f32.gmra.mrb[0].mxu0 %v440
          %v542 = vpop.f32.mrb[0].mxu0
          %v543 = vadd.f32 0.0, %v542
          %v544 = vpop.f32.mrb[0].mxu0
          %545 = vmatprep.mubr.f32.mxu0 0.0
          %546 = vmatmul.mubr.f32.gmra.mrb[0].mxu0 %v441
          %v547 = vpop.f32.mrb[0].mxu0
          %v548 = vadd.f32 0.0, %v547
          %v549 = vpop.f32.mrb[0].mxu0
          %550 = vmatprep.mubr.f32.mxu0 0.0
          %551 = vmatmul.mubr.f32.gmra.mrb[0].mxu0 %v442
          %v552 = vpop.f32.mrb[0].mxu0
          %v553 = vadd.f32 0.0, %v552
          %v554 = vpop.f32.mrb[0].mxu0
          %555 = vmatprep.mubr.f32.mxu0 0.0
          %556 = vmatmul.mubr.f32.gmra.mrb[0].mxu0 %v443
          %v557 = vpop.f32.mrb[0].mxu0
          %v558 = vadd.f32 0.0, %v557
          %v559 = vpop.f32.mrb[0].mxu0
          %560 = vmatprep.mubr.f32.mxu0 0.0
          %561 = vmatmul.mubr.f32.gmra.mrb[0].mxu0 %v444
          %v562 = vpop.f32.mrb[0].mxu0
          %v563 = vadd.f32 0.0, %v562
          %v564 = vpop.f32.mrb[0].mxu0
          %565 = vdwg.mxu0
          %v566 = vld [vmem:[%s421] sm:$0x1]
          %v567 = vld [vmem:[%s424] sm:$0x1]
          %v568 = vadd.f32 %v528, %v533
          %v569 = vadd.f32 %v568, %v538
          %v570 = vadd.f32 %v569, %v543
          %v571 = vadd.f32 %v570, %v548
          %v572 = vadd.f32 %v571, %v553
          %v573 = vadd.f32 %v572, %v558
          %v574 = vadd.f32 %v573, %v563
          %v575 = vrot.slane %v574, 4
          %v576 = vadd.f32 %v574, %v575
          %v577 = vrot.slane %v576, 2
          %v578 = vadd.f32 %v576, %v577
          %v579 = vrot.slane %v578, 1
          %v580 = vadd.f32 %v578, %v579
          %v581 = vrcp.pop 64.0
          %v582 = vmul.f32 %v580, %v581
          %v583 = vsub.f32 %v528, %v582
          %v584 = vsub.f32 %v533, %v582
          %v585 = vsub.f32 %v538, %v582
          %v586 = vsub.f32 %v543, %v582
          %v587 = vsub.f32 %v548, %v582
          %v588 = vsub.f32 %v553, %v582
          %v589 = vsub.f32 %v558, %v582
          %v590 = vsub.f32 %v563, %v582
          %v591 = vmul.f32 %v583, %v583
          %v592 = vmul.f32 %v584, %v584
          %v593 = vmul.f32 %v585, %v585
          %v594 = vmul.f32 %v586, %v586
          %v595 = vmul.f32 %v587, %v587
          %v596 = vmul.f32 %v588, %v588
          %v597 = vmul.f32 %v589, %v589
          %v598 = vmul.f32 %v590, %v590
          %v599 = vadd.f32 %v591, %v592
          %v600 = vadd.f32 %v599, %v593
          %v601 = vadd.f32 %v600, %v594
          %v602 = vadd.f32 %v601, %v595
          %v603 = vadd.f32 %v602, %v596
          %v604 = vadd.f32 %v603, %v597
          %v605 = vadd.f32 %v604, %v598
          %v606 = vrot.slane %v605, 4
          %v607 = vadd.f32 %v605, %v606
          %v608 = vrot.slane %v607, 2
          %v609 = vadd.f32 %v607, %v608
          %v610 = vrot.slane %v609, 1
          %v611 = vadd.f32 %v609, %v610
          %v612 = vmul.f32 %v611, %v581
          %v613 = vadd.f32 %v612, 1e-05
          %v614 = vrsqrt.pop %v613
          %v615 = vmul.f32 %v566, %v614
          %v616 = vmul.f32 %v582, %v615
          %v617 = vsub.f32 %v567, %v616
          %v619 = vlaneseq
          %v620 = vshrl.u32 %v619, 7
          %v621 = vsub.s32 0, %v620
          %v622 = vrot.slane %v615, %v621
          %v624 = vmul.f32 %v528, %v622
          %v625 = vmul.f32 %v533, %v622
          %v626 = vmul.f32 %v538, %v622
          %v627 = vmul.f32 %v543, %v622
          %v628 = vmul.f32 %v548, %v622
          %v629 = vmul.f32 %v553, %v622
          %v630 = vmul.f32 %v558, %v622
          %v631 = vmul.f32 %v563, %v622
          %v633 = vlaneseq
          %v634 = vshrl.u32 %v633, 7
          %v635 = vsub.s32 0, %v634
          %v636 = vrot.slane %v617, %v635
          %v638 = vadd.f32 %v624, %v636
          %v639 = vadd.f32 %v625, %v636
          %v640 = vadd.f32 %v626, %v636
          %v641 = vadd.f32 %v627, %v636
          %v642 = vadd.f32 %v628, %v636
          %v643 = vadd.f32 %v629, %v636
          %v644 = vadd.f32 %v630, %v636
          %v645 = vadd.f32 %v631, %v636
          %v646 = vmax.f32 %v638, 0.0
          %v647 = vmax.f32 %v639, 0.0
          %v648 = vmax.f32 %v640, 0.0
          %v649 = vmax.f32 %v641, 0.0
          %v650 = vmax.f32 %v642, 0.0
          %v651 = vmax.f32 %v643, 0.0
          %v652 = vmax.f32 %v644, 0.0
          %v653 = vmax.f32 %v645, 0.0
          %s654 = sshra.s32 %s432, 7
          %s655 = sand.u32 %s432, 127
          %s656 = scalar_lea.vmem [#allocation2], %s654
          %657 = vst [vmem:[%s656] sm:$0xff] %v646
          %658 = vst [vmem:[%s656 + $0x8] sm:$0xff] %v647
          %659 = vst [vmem:[%s656 + $0x10] sm:$0xff] %v648
          %660 = vst [vmem:[%s656 + $0x18] sm:$0xff] %v649
          %661 = vst [vmem:[%s656 + $0x20] sm:$0xff] %v650
          %662 = vst [vmem:[%s656 + $0x28] sm:$0xff] %v651
          %663 = vst [vmem:[%s656 + $0x30] sm:$0xff] %v652
          %664 = vst [vmem:[%s656 + $0x38] sm:$0xff] %v653
        $region64: #{tpu_custom_call.1} parent=47 // pred_fallthru
          _
        %p665 = scmp.eq.s32.totalorder %s31, 1
        // Predicated region
        $region65: #{tpu_custom_call.1} parent=47 // pred_check
          %p666 = pneg %p665
        $region66: #{tpu_custom_call.1} parent=47 // pred_check_branch
          %668 = sbr.rel (%p666) target = $region68
        $region67: #{tpu_custom_call.1} parent=47 // pred_region
          %v669 = vld [vmem:[#allocation2] sm:$0xff]
          %v670 = vld [vmem:[#allocation2 + $0x8] sm:$0xff]
          %v671 = vld [vmem:[#allocation2 + $0x10] sm:$0xff]
          %v672 = vld [vmem:[#allocation2 + $0x18] sm:$0xff]
          %v673 = vld [vmem:[#allocation2 + $0x20] sm:$0xff]
          %v674 = vld [vmem:[#allocation2 + $0x28] sm:$0xff]
          %v675 = vld [vmem:[#allocation2 + $0x30] sm:$0xff]
          %v676 = vld [vmem:[#allocation2 + $0x38] sm:$0xff]
          %v677 = vld [vmem:[%s368] sm:$0xff]
          %v678 = vld [vmem:[%s368 + $0x8] sm:$0xff]
          %v679 = vld [vmem:[%s368 + $0x10] sm:$0xff]
          %v680 = vld [vmem:[%s368 + $0x18] sm:$0xff]
          %v681 = vld [vmem:[%s368 + $0x20] sm:$0xff]
          %v682 = vld [vmem:[%s368 + $0x28] sm:$0xff]
          %v683 = vld [vmem:[%s368 + $0x30] sm:$0xff]
          %v684 = vld [vmem:[%s368 + $0x38] sm:$0xff]
          %v685 = vld [vmem:[%s368 + $0x40] sm:$0xff]
          %v686 = vld [vmem:[%s368 + $0x48] sm:$0xff]
          %v687 = vld [vmem:[%s368 + $0x50] sm:$0xff]
          %v688 = vld [vmem:[%s368 + $0x58] sm:$0xff]
          %v689 = vld [vmem:[%s368 + $0x60] sm:$0xff]
          %v690 = vld [vmem:[%s368 + $0x68] sm:$0xff]
          %v691 = vld [vmem:[%s368 + $0x70] sm:$0xff]
          %v692 = vld [vmem:[%s368 + $0x78] sm:$0xff]
          %693 = vmatprep.subr.mxu0 0.0
          %694 = vmatpush1.msra.mxu0 %v677
          %695 = vmatprep.subr.mxu0 0.0
          %696 = vmatpush1.msra.mxu0 %v678
          %697 = vmatprep.subr.mxu0 0.0
          %698 = vmatpush1.msra.mxu0 %v679
          %699 = vmatprep.subr.mxu0 0.0
          %700 = vmatpush1.msra.mxu0 %v680
          %701 = vmatprep.subr.mxu0 0.0
          %702 = vmatpush1.msra.mxu0 %v681
          %703 = vmatprep.subr.mxu0 0.0
          %704 = vmatpush1.msra.mxu0 %v682
          %705 = vmatprep.subr.mxu0 0.0
          %706 = vmatpush1.msra.mxu0 %v683
          %707 = vmatprep.subr.mxu0 0.0
          %708 = vmatpush1.msra.mxu0 %v684
          %709 = vmatprep.subr.mxu0 0.0
          %710 = vmatpush1.msra.mxu0 %v685
          %711 = vmatprep.subr.mxu0 0.0
          %712 = vmatpush1.msra.mxu0 %v686
          %713 = vmatprep.subr.mxu0 0.0
          %714 = vmatpush1.msra.mxu0 %v687
          %715 = vmatprep.subr.mxu0 0.0
          %716 = vmatpush1.msra.mxu0 %v688
          %717 = vmatprep.subr.mxu0 0.0
          %718 = vmatpush1.msra.mxu0 %v689
          %719 = vmatprep.subr.mxu0 0.0
          %720 = vmatpush1.msra.mxu0 %v690
          %721 = vmatprep.subr.mxu0 0.0
          %722 = vmatpush1.msra.mxu0 %v691
          %723 = vmatprep.subr.mxu0 0.0
          %724 = vmatpush1.msra.mxu0 %v692
          %725 = vmatprep.subr.mxu0 0.0
          %726 = vmatpush1.msra.mxu0 0.0
          %727 = vmatprep.subr.mxu0 0.0
          %728 = vmatpush1.msra.mxu0 0.0
          %729 = vmatprep.subr.mxu0 0.0
          %730 = vmatpush1.msra.mxu0 0.0
          %731 = vmatprep.subr.mxu0 0.0
          %732 = vmatpush1.msra.mxu0 0.0
          %733 = vmatprep.subr.mxu0 0.0
          %734 = vmatpush1.msra.mxu0 0.0
          %735 = vmatprep.subr.mxu0 0.0
          %736 = vmatpush1.msra.mxu0 0.0
          %737 = vmatprep.subr.mxu0 0.0
          %738 = vmatpush1.msra.mxu0 0.0
          %739 = vmatprep.subr.mxu0 0.0
          %740 = vmatpush1.msra.mxu0 0.0
          %741 = vmatprep.subr.mxu0 0.0
          %742 = vmatpush1.msra.mxu0 0.0
          %743 = vmatprep.subr.mxu0 0.0
          %744 = vmatpush1.msra.mxu0 0.0
          %745 = vmatprep.subr.mxu0 0.0
          %746 = vmatpush1.msra.mxu0 0.0
          %747 = vmatprep.subr.mxu0 0.0
          %748 = vmatpush1.msra.mxu0 0.0
          %749 = vmatprep.subr.mxu0 0.0
          %750 = vmatpush1.msra.mxu0 0.0
          %751 = vmatprep.subr.mxu0 0.0
          %752 = vmatpush1.msra.mxu0 0.0
          %753 = vmatprep.subr.mxu0 0.0
          %754 = vmatpush1.msra.mxu0 0.0
          %755 = vmatprep.subr.mxu0 0.0
          %756 = vmatpush1.msra.mxu0 0.0
          %757 = vmatprep.mubr.f32.mxu0 0.0
          %758 = vmatmul.mubr.f32.gmra.mrb[0].mxu0 %v669
          %v759 = vpop.f32.mrb[0].mxu0
          %v760 = vadd.f32 0.0, %v759
          %v761 = vpop.f32.mrb[0].mxu0
          %762 = vmatprep.mubr.f32.mxu0 0.0
          %763 = vmatmul.mubr.f32.gmra.mrb[0].mxu0 %v670
          %v764 = vpop.f32.mrb[0].mxu0
          %v765 = vadd.f32 0.0, %v764
          %v766 = vpop.f32.mrb[0].mxu0
          %767 = vmatprep.mubr.f32.mxu0 0.0
          %768 = vmatmul.mubr.f32.gmra.mrb[0].mxu0 %v671
          %v769 = vpop.f32.mrb[0].mxu0
          %v770 = vadd.f32 0.0, %v769
          %v771 = vpop.f32.mrb[0].mxu0
          %772 = vmatprep.mubr.f32.mxu0 0.0
          %773 = vmatmul.mubr.f32.gmra.mrb[0].mxu0 %v672
          %v774 = vpop.f32.mrb[0].mxu0
          %v775 = vadd.f32 0.0, %v774
          %v776 = vpop.f32.mrb[0].mxu0
          %777 = vmatprep.mubr.f32.mxu0 0.0
          %778 = vmatmul.mubr.f32.gmra.mrb[0].mxu0 %v673
          %v779 = vpop.f32.mrb[0].mxu0
          %v780 = vadd.f32 0.0, %v779
          %v781 = vpop.f32.mrb[0].mxu0
          %782 = vmatprep.mubr.f32.mxu0 0.0
          %783 = vmatmul.mubr.f32.gmra.mrb[0].mxu0 %v674
          %v784 = vpop.f32.mrb[0].mxu0
          %v785 = vadd.f32 0.0, %v784
          %v786 = vpop.f32.mrb[0].mxu0
          %787 = vmatprep.mubr.f32.mxu0 0.0
          %788 = vmatmul.mubr.f32.gmra.mrb[0].mxu0 %v675
          %v789 = vpop.f32.mrb[0].mxu0
          %v790 = vadd.f32 0.0, %v789
          %v791 = vpop.f32.mrb[0].mxu0
          %792 = vmatprep.mubr.f32.mxu0 0.0
          %793 = vmatmul.mubr.f32.gmra.mrb[0].mxu0 %v676
          %v794 = vpop.f32.mrb[0].mxu0
          %v795 = vadd.f32 0.0, %v794
          %v796 = vpop.f32.mrb[0].mxu0
          %797 = vdwg.mxu0
          %v798 = vld [vmem:[%s427] sm:$0x1]
          %v799 = vld [vmem:[%s430] sm:$0x1]
          %v800 = vadd.f32 %v760, %v765
          %v801 = vadd.f32 %v800, %v770
          %v802 = vadd.f32 %v801, %v775
          %v803 = vadd.f32 %v802, %v780
          %v804 = vadd.f32 %v803, %v785
          %v805 = vadd.f32 %v804, %v790
          %v806 = vadd.f32 %v805, %v795
          %v807 = vrot.slane %v806, 4
          %v808 = vadd.f32 %v806, %v807
          %v809 = vrot.slane %v808, 2
          %v810 = vadd.f32 %v808, %v809
          %v811 = vrot.slane %v810, 1
          %v812 = vadd.f32 %v810, %v811
          %v813 = vrcp.pop 64.0
          %v814 = vmul.f32 %v812, %v813
          %v815 = vsub.f32 %v760, %v814
          %v816 = vsub.f32 %v765, %v814
          %v817 = vsub.f32 %v770, %v814
          %v818 = vsub.f32 %v775, %v814
          %v819 = vsub.f32 %v780, %v814
          %v820 = vsub.f32 %v785, %v814
          %v821 = vsub.f32 %v790, %v814
          %v822 = vsub.f32 %v795, %v814
          %v823 = vmul.f32 %v815, %v815
          %v824 = vmul.f32 %v816, %v816
          %v825 = vmul.f32 %v817, %v817
          %v826 = vmul.f32 %v818, %v818
          %v827 = vmul.f32 %v819, %v819
          %v828 = vmul.f32 %v820, %v820
          %v829 = vmul.f32 %v821, %v821
          %v830 = vmul.f32 %v822, %v822
          %v831 = vadd.f32 %v823, %v824
          %v832 = vadd.f32 %v831, %v825
          %v833 = vadd.f32 %v832, %v826
          %v834 = vadd.f32 %v833, %v827
          %v835 = vadd.f32 %v834, %v828
          %v836 = vadd.f32 %v835, %v829
          %v837 = vadd.f32 %v836, %v830
          %v838 = vrot.slane %v837, 4
          %v839 = vadd.f32 %v837, %v838
          %v840 = vrot.slane %v839, 2
          %v841 = vadd.f32 %v839, %v840
          %v842 = vrot.slane %v841, 1
          %v843 = vadd.f32 %v841, %v842
          %v844 = vmul.f32 %v843, %v813
          %v845 = vadd.f32 %v844, 1e-05
          %v846 = vrsqrt.pop %v845
          %v847 = vmul.f32 %v798, %v846
          %v848 = vmul.f32 %v814, %v847
          %v849 = vsub.f32 %v799, %v848
          %v851 = vlaneseq
          %v852 = vshrl.u32 %v851, 7
          %v853 = vsub.s32 0, %v852
          %v854 = vrot.slane %v847, %v853
          %v856 = vmul.f32 %v760, %v854
          %v857 = vmul.f32 %v765, %v854
          %v858 = vmul.f32 %v770, %v854
          %v859 = vmul.f32 %v775, %v854
          %v860 = vmul.f32 %v780, %v854
          %v861 = vmul.f32 %v785, %v854
          %v862 = vmul.f32 %v790, %v854
          %v863 = vmul.f32 %v795, %v854
          %v865 = vlaneseq
          %v866 = vshrl.u32 %v865, 7
          %v867 = vsub.s32 0, %v866
          %v868 = vrot.slane %v849, %v867
          %v870 = vadd.f32 %v856, %v868
          %v871 = vadd.f32 %v857, %v868
          %v872 = vadd.f32 %v858, %v868
          %v873 = vadd.f32 %v859, %v868
          %v874 = vadd.f32 %v860, %v868
          %v875 = vadd.f32 %v861, %v868
          %v876 = vadd.f32 %v862, %v868
          %v877 = vadd.f32 %v863, %v868
          %v878 = vmax.f32 %v870, 0.0
          %v879 = vmax.f32 %v871, 0.0
          %v880 = vmax.f32 %v872, 0.0
          %v881 = vmax.f32 %v873, 0.0
          %v882 = vmax.f32 %v874, 0.0
          %v883 = vmax.f32 %v875, 0.0
          %v884 = vmax.f32 %v876, 0.0
          %v885 = vmax.f32 %v877, 0.0
          %s886 = sshra.s32 %s432, 7
          %s887 = sand.u32 %s432, 127
          %s888 = scalar_lea.vmem [#allocation5], %s886
          %v889 = vld [vmem:[%s888] sm:$0xff]
          %v890 = vld [vmem:[%s888 + $0x8] sm:$0xff]
          %v891 = vld [vmem:[%s888 + $0x10] sm:$0xff]
          %v892 = vld [vmem:[%s888 + $0x18] sm:$0xff]
          %v893 = vld [vmem:[%s888 + $0x20] sm:$0xff]
          %v894 = vld [vmem:[%s888 + $0x28] sm:$0xff]
          %v895 = vld [vmem:[%s888 + $0x30] sm:$0xff]
          %v896 = vld [vmem:[%s888 + $0x38] sm:$0xff]
          %v897 = vadd.f32 %v889, %v878
          %v898 = vadd.f32 %v890, %v879
          %v899 = vadd.f32 %v891, %v880
          %v900 = vadd.f32 %v892, %v881
          %v901 = vadd.f32 %v893, %v882
          %v902 = vadd.f32 %v894, %v883
          %v903 = vadd.f32 %v895, %v884
          %v904 = vadd.f32 %v896, %v885
          %905 = vst [vmem:[%s415] sm:$0xff] %v897
          %906 = vst [vmem:[%s415 + $0x8] sm:$0xff] %v898
          %907 = vst [vmem:[%s415 + $0x10] sm:$0xff] %v899
          %908 = vst [vmem:[%s415 + $0x18] sm:$0xff] %v900
          %909 = vst [vmem:[%s415 + $0x20] sm:$0xff] %v901
          %910 = vst [vmem:[%s415 + $0x28] sm:$0xff] %v902
          %911 = vst [vmem:[%s415 + $0x30] sm:$0xff] %v903
          %912 = vst [vmem:[%s415 + $0x38] sm:$0xff] %v904
        $region68: #{tpu_custom_call.1} parent=47 // pred_fallthru
          _
        %s913 = sand.u32 %s232, 1
        %s914 = scalar_lea.sflag [#allocation7], %s913
        %s915 = sand.u32 %s232, 1
        %s916 = smul.addr %s915, 64
        %s917 = scalar_lea.vmem [#allocation11], %s916
        // Predicated region
        $region69: #{tpu_custom_call.1} parent=47 // pred_check
          %p918 = pneg %p242
        $region70: #{tpu_custom_call.1} parent=47 // pred_check_branch
          %920 = sbr.rel (%p918) target = $region72
        $region71: #{tpu_custom_call.1} parent=47 // pred_region
          %s921 = smul.u32 %s32, %s31
          %s923 = ssub.s32 1024, 1024
          %924 = vsyncadd %s914, %s923
          %s925 = smul.addr %s921, 128
          %s926 = scalar_lea.hbm %s8, %s925
          %s927 = sshll.u32 %s917, 4
          %s928 = int_to_ptr.vmem [resolvable:$true] %s927
          %933 = dma.vmem_to_hbm [thread:$0]  %s928, 1024, %s926, %s914, 128, 128, 8
        $region72: #{tpu_custom_call.1} parent=47 // pred_fallthru
          _
      $region48: #{tpu_custom_call.1} parent=5 // pred_fallthru
        _
      %p934 = scmp.le.s32.totalorder 2, %s22
      // Predicated region
      $region73: #{tpu_custom_call.1} parent=5 // pred_check
        %p935 = pneg %p934
      $region74: #{tpu_custom_call.1} parent=5 // pred_check_branch
        %937 = sbr.rel (%p935) target = $region76
      $region75: #{tpu_custom_call.1} parent=5 // pred_region
        %s938 = ssub.s32 %s22, 2
        // Predicated region
        $region77: #{tpu_custom_call.1} parent=75 // pred_check
          %p939 = pneg %p248
        $region78: #{tpu_custom_call.1} parent=75 // pred_check_branch
          %941 = sbr.rel (%p939) target = $region80
        $region79: #{tpu_custom_call.1} parent=75 // pred_region
          %s942 = sand.u32 %s233, 1
          %s943 = scalar_lea.sflag [#allocation7], %s942
          %s944 = sand.u32 %s233, 1
          %s945 = smul.addr %s944, 64
          %s946 = scalar_lea.vmem [#allocation11], %s945
          %947 = dma.done %s943, 1024
        $region80: #{tpu_custom_call.1} parent=75 // pred_fallthru
          _
      $region76: #{tpu_custom_call.1} parent=5 // pred_fallthru
        _
    $region6: #{tpu_custom_call.1} parent=1 // loop_footer
      %s26 = sadd.s32 1, %s22
    $region7: #{tpu_custom_call.1} parent=1 // loop_footer_branch
      %21 = sbr.rel target = $region3
    $region8: #{tpu_custom_call.1} parent=1 // loop_exit
      _
    %948 = vsyncpa [#allocation6], 1
    %s949 = scalar_lea.sflag [#allocation6], 1
    %950 = vsyncpa %s949, 1
    %951 = vsyncpa [#allocation9], 1
    %s952 = scalar_lea.sflag [#allocation9], 1
    %953 = vsyncpa %s952, 1
    %954 = vsyncpa [#allocation7], 1
    %s955 = scalar_lea.sflag [#allocation7], 1
    %956 = vsyncpa %s955, 1

// kernel: tpu_custom_call.1
$region0: #{tpu_custom_call.1}
  #allocation0 [shape = 'u32[]', space=smem, size = 0x4, offset = 0x4, fixed_abs, tag = 'smem constant byte address 0x4 - core index']
  #allocation1 [shape = 'u32[144,128]{1,0:T(1,128)}', space=vmem, size = 0x12000, scoped, tag = 'internal scratch']
  #allocation2 [shape = 'f32[64,128]{1,0:T(8,128)}', space=vmem, size = 0x8000, scoped, tag = 'scratch operand']
  #allocation3 [shape = 's32[1]{0}', space=sflag, size = 0x4, scoped, tag = 'scoped memory for tpu_custom_call.1']
  #allocation4 [shape = 's32[1]{0:T(128)S(6)}', space=smem, size = 0x200, scoped, tag = 'prefetched SMEM operand 0']
  %s0 = inlined_call_operand.<no memory space> [shape: s32[1], index: 0, kind: input, shape index: {}]
  %s1 = inlined_call_operand.hbm [shape: f32[64,128], index: 1, kind: input, shape index: {}]
  %s2 = inlined_call_operand.hbm [shape: f32[128,128], index: 2, kind: input, shape index: {}]
  %s3 = inlined_call_operand.hbm [shape: f32[128,128], index: 3, kind: input, shape index: {}]
  %s4 = inlined_call_operand.vmem [shape: f32[1,128], index: 4, kind: input, shape index: {}]
  %s5 = inlined_call_operand.vmem [shape: f32[1,128], index: 5, kind: input, shape index: {}]
  %s6 = inlined_call_operand.vmem [shape: f32[1,128], index: 6, kind: input, shape index: {}]
  %s7 = inlined_call_operand.vmem [shape: f32[1,128], index: 7, kind: input, shape index: {}]
  %s8 = inlined_call_operand.hbm [shape: f32[64,128], index: 8, kind: output, shape index: {}]
  %s9 = sld [smem:[#allocation0]]
  $region81: #{tpu_custom_call.1} parent=0
    _
  %s11 = ssub.s32 1, %s9
  %s12 = scalar_select 0, %s11, %s9
  %13 = sst [smem:[#allocation4]] %s0
  $region1: #{tpu_custom_call.1} parent=0
    #allocation5 [shape = 'u8[32768]{0}', space=vmem, size = 0x8000, scoped, tag = 'input window, operand 1, single buffered']
    #allocation6 [shape = 's32[2]{0}', space=sflag, size = 0x8, scoped, tag = 'scoped memory for tpu_custom_call.1']
    #allocation7 [shape = 's32[2]{0}', space=sflag, size = 0x8, scoped, tag = 'scoped memory for tpu_custom_call.1']
    #allocation8 [shape = 'u8[131072]{0}', space=vmem, size = 0x20000, scoped, tag = 'input window, operand 2']
    #allocation9 [shape = 's32[2]{0}', space=sflag, size = 0x8, scoped, tag = 'scoped memory for tpu_custom_call.1']
    #allocation10 [shape = 'u8[131072]{0}', space=vmem, size = 0x20000, scoped, tag = 'input window, operand 3']
    #allocation11 [shape = 'u8[65536]{0}', space=vmem, size = 0x10000, scoped, tag = 'output window, operand 0']
    %14 = vsyncpa [#allocation6], 0
    %15 = vsyncpa [#allocation9], 0
    %s16 = scalar_lea.sflag [#allocation9], 1
    %17 = vsyncpa %s16, 0
    %18 = vsyncpa [#allocation7], 0
    %s19 = scalar_lea.sflag [#allocation7], 1
    %20 = vsyncpa %s19, 0
    loop: start=0, step=1, limit=4
    $region2: #{tpu_custom_call.1} parent=1 // loop_pre_header
      _
    $region3: #{tpu_custom_call.1} parent=1 // loop_header
      %s22 = sphi 0, %s26
      %p23 = scmp.ge.s32.totalorder %s22, 4
      %s29 = sphi 0, %s41
      %s30 = sphi 0, %s37
      %s31 = sphi 0, %s29
      %s32 = sphi 0, %s30
      %s33 = sphi 0, %s31
      %s34 = sphi 0, %s32
      %s42 = sphi 0, %s42
      %s44 = sphi 0, %s42
      %s45 = sphi 0, %s44
      %s59 = sphi 0, %s45
      %s69 = sphi 0, %s71
      %s72 = sphi 0, %s69
      %s73 = sphi 0, %s72
      %s89 = sphi 0, %s73
      %s97 = sphi 0, %s99
      %s100 = sphi 0, %s97
      %s101 = sphi 0, %s100
      %s117 = sphi 0, %s101
      %s123 = sphi 0, %s125
      %s126 = sphi 0, %s123
      %s127 = sphi 0, %s126
      %s143 = sphi 0, %s127
      %s149 = sphi 0, %s151
      %s152 = sphi 0, %s149
      %s153 = sphi 0, %s152
      %s169 = sphi 0, %s153
      %s175 = sphi 0, %s177
      %s178 = sphi 0, %s175
      %s179 = sphi 0, %s178
      %s195 = sphi 0, %s179
      %s201 = sphi 0, %s203
      %s204 = sphi 0, %s201
      %s205 = sphi 0, %s204
      %s221 = sphi 0, %s205
      %s229 = sphi 0, %s231
      %s232 = sphi 0, %s229
      %s233 = sphi 0, %s232
      %s249 = sphi 0, %s233
    $region4: #{tpu_custom_call.1} parent=1 // loop_header_branch
      %25 = sbr.rel (%p23) target = $region8
    $region5: #{tpu_custom_call.1} parent=1 // loop_body
      %s27 = ssub.s32 %s22, 1
      %s28 = ssub.s32 %s22, 2
      %s35 = sadd.s32 1, %s30
      %p36 = scmp.ge.s32.totalorder %s35, 1
      %s37 = scalar_select %p36, 0, %s35
      %s38 = sadd.s32 1, %s29
      %s39 = scalar_select %p36, %s38, %s29
      %p40 = scmp.ge.s32.totalorder %s39, 2
      %s41 = scalar_select %p40, 0, %s39
      %s43 = sadd.s32 %s42, 1
      %p46 = scmp.eq.s32.totalorder %s22, 1
      %p47 = scmp.ne.s32.totalorder %s42, %s44
      %p48 = scmp.eq.s32.totalorder %s22, 0
      %p49 = por %p47, %p48
      %p50 = scmp.ne.s32.totalorder %s42, %s44
      %p51 = scmp.eq.s32.totalorder %s27, 1
      %p52 = por %p50, %p51
      %p53 = scmp.ne.s32.totalorder %s44, %s45
      %p54 = scmp.eq.s32.totalorder %s27, 0
      %p55 = por %p53, %p54
      %p56 = scmp.ne.s32.totalorder %s44, %s45
      %p57 = scmp.eq.s32.totalorder %s28, 1
      %p58 = por %p56, %p57
      %p60 = scmp.ne.s32.totalorder %s45, %s59
      %p61 = scmp.eq.s32.totalorder %s28, 0
      %p62 = por %p60, %p61
      %s63 = ssub.s32 1, %s29
      %s64 = smul.u32 %s30, %s63
      %s65 = ssub.s32 1, %s41
      %s66 = smul.u32 %s37, %s65
      %s67 = ssub.s32 %s64, %s66
      %p68 = scmp.eq.s32.totalorder %s67, 0
      %s70 = sadd.s32 %s69, 1
      %s71 = scalar_select %p68, %s69, %s70
      %p74 = pneg %p68
      %p75 = scmp.eq.s32.totalorder %s22, 1
      %p76 = por %p74, %p75
      %p77 = scmp.ne.s32.totalorder %s69, %s72
      %p78 = scmp.eq.s32.totalorder %s22, 0
      %p79 = por %p77, %p78
      %p80 = scmp.ne.s32.totalorder %s69, %s72
      %p81 = scmp.eq.s32.totalorder %s27, 1
      %p82 = por %p80, %p81
      %p83 = scmp.ne.s32.totalorder %s72, %s73
      %p84 = scmp.eq.s32.totalorder %s27, 0
      %p85 = por %p83, %p84
      %p86 = scmp.ne.s32.totalorder %s72, %s73
      %p87 = scmp.eq.s32.totalorder %s28, 1
      %p88 = por %p86, %p87
      %p90 = scmp.ne.s32.totalorder %s73, %s89
      %p91 = scmp.eq.s32.totalorder %s28, 0
      %p92 = por %p90, %p91
      %s93 = smul.u32 %s30, %s29
      %s94 = smul.u32 %s37, %s41
      %s95 = ssub.s32 %s93, %s94
      %p96 = scmp.eq.s32.totalorder %s95, 0
      %s98 = sadd.s32 %s97, 1
      %s99 = scalar_select %p96, %s97, %s98
      %p102 = pneg %p96
      %p103 = scmp.eq.s32.totalorder %s22, 1
      %p104 = por %p102, %p103
      %p105 = scmp.ne.s32.totalorder %s97, %s100
      %p106 = scmp.eq.s32.totalorder %s22, 0
      %p107 = por %p105, %p106
      %p108 = scmp.ne.s32.totalorder %s97, %s100
      %p109 = scmp.eq.s32.totalorder %s27, 1
      %p110 = por %p108, %p109
      %p111 = scmp.ne.s32.totalorder %s100, %s101
      %p112 = scmp.eq.s32.totalorder %s27, 0
      %p113 = por %p111, %p112
      %p114 = scmp.ne.s32.totalorder %s100, %s101
      %p115 = scmp.eq.s32.totalorder %s28, 1
      %p116 = por %p114, %p115
      %p118 = scmp.ne.s32.totalorder %s101, %s117
      %p119 = scmp.eq.s32.totalorder %s28, 0
      %p120 = por %p118, %p119
      %s121 = ssub.s32 %s30, %s37
      %p122 = scmp.eq.s32.totalorder %s121, 0
      %s124 = sadd.s32 %s123, 1
      %s125 = scalar_select %p122, %s123, %s124
      %p128 = pneg %p122
      %p129 = scmp.eq.s32.totalorder %s22, 1
      %p130 = por %p128, %p129
      %p131 = scmp.ne.s32.totalorder %s123, %s126
      %p132 = scmp.eq.s32.totalorder %s22, 0
      %p133 = por %p131, %p132
      %p134 = scmp.ne.s32.totalorder %s123, %s126
      %p135 = scmp.eq.s32.totalorder %s27, 1
      %p136 = por %p134, %p135
      %p137 = scmp.ne.s32.totalorder %s126, %s127
      %p138 = scmp.eq.s32.totalorder %s27, 0
      %p139 = por %p137, %p138
      %p140 = scmp.ne.s32.totalorder %s126, %s127
      %p141 = scmp.eq.s32.totalorder %s28, 1
      %p142 = por %p140, %p141
      %p144 = scmp.ne.s32.totalorder %s127, %s143
      %p145 = scmp.eq.s32.totalorder %s28, 0
      %p146 = por %p144, %p145
      %s147 = ssub.s32 %s30, %s37
      %p148 = scmp.eq.s32.totalorder %s147, 0
      %s150 = sadd.s32 %s149, 1
      %s151 = scalar_select %p148, %s149, %s150
      %p154 = pneg %p148
      %p155 = scmp.eq.s32.totalorder %s22, 1
      %p156 = por %p154, %p155
      %p157 = scmp.ne.s32.totalorder %s149, %s152
      %p158 = scmp.eq.s32.totalorder %s22, 0
      %p159 = por %p157, %p158
      %p160 = scmp.ne.s32.totalorder %s149, %s152
      %p161 = scmp.eq.s32.totalorder %s27, 1
      %p162 = por %p160, %p161
      %p163 = scmp.ne.s32.totalorder %s152, %s153
      %p164 = scmp.eq.s32.totalorder %s27, 0
      %p165 = por %p163, %p164
      %p166 = scmp.ne.s32.totalorder %s152, %s153
      %p167 = scmp.eq.s32.totalorder %s28, 1
      %p168 = por %p166, %p167
      %p170 = scmp.ne.s32.totalorder %s153, %s169
      %p171 = scmp.eq.s32.totalorder %s28, 0
      %p172 = por %p170, %p171
      %s173 = ssub.s32 %s30, %s37
      %p174 = scmp.eq.s32.totalorder %s173, 0
      %s176 = sadd.s32 %s175, 1
      %s177 = scalar_select %p174, %s175, %s176
      %p180 = pneg %p174
      %p181 = scmp.eq.s32.totalorder %s22, 1
      %p182 = por %p180, %p181
      %p183 = scmp.ne.s32.totalorder %s175, %s178
      %p184 = scmp.eq.s32.totalorder %s22, 0
      %p185 = por %p183, %p184
      %p186 = scmp.ne.s32.totalorder %s175, %s178
      %p187 = scmp.eq.s32.totalorder %s27, 1
      %p188 = por %p186, %p187
      %p189 = scmp.ne.s32.totalorder %s178, %s179
      %p190 = scmp.eq.s32.totalorder %s27, 0
      %p191 = por %p189, %p190
      %p192 = scmp.ne.s32.totalorder %s178, %s179
      %p193 = scmp.eq.s32.totalorder %s28, 1
      %p194 = por %p192, %p193
      %p196 = scmp.ne.s32.totalorder %s179, %s195
      %p197 = scmp.eq.s32.totalorder %s28, 0
      %p198 = por %p196, %p197
      %s199 = ssub.s32 %s30, %s37
      %p200 = scmp.eq.s32.totalorder %s199, 0
      %s202 = sadd.s32 %s201, 1
      %s203 = scalar_select %p200, %s201, %s202
      %p206 = pneg %p200
      %p207 = scmp.eq.s32.totalorder %s22, 1
      %p208 = por %p206, %p207
      %p209 = scmp.ne.s32.totalorder %s201, %s204
      %p210 = scmp.eq.s32.totalorder %s22, 0
      %p211 = por %p209, %p210
      %p212 = scmp.ne.s32.totalorder %s201, %s204
      %p213 = scmp.eq.s32.totalorder %s27, 1
      %p214 = por %p212, %p213
      %p215 = scmp.ne.s32.totalorder %s204, %s205
      %p216 = scmp.eq.s32.totalorder %s27, 0
      %p217 = por %p215, %p216
      %p218 = scmp.ne.s32.totalorder %s204, %s205
      %p219 = scmp.eq.s32.totalorder %s28, 1
      %p220 = por %p218, %p219
      %p222 = scmp.ne.s32.totalorder %s205, %s221
      %p223 = scmp.eq.s32.totalorder %s28, 0
      %p224 = por %p222, %p223
      %s225 = smul.u32 %s30, %s29
      %s226 = smul.u32 %s37, %s41
      %s227 = ssub.s32 %s225, %s226
      %p228 = scmp.eq.s32.totalorder %s227, 0
      %s230 = sadd.s32 %s229, 1
      %s231 = scalar_select %p228, %s229, %s230
      %p234 = pneg %p228
      %p235 = scmp.eq.s32.totalorder %s22, 1
      %p236 = por %p234, %p235
      %p237 = scmp.ne.s32.totalorder %s229, %s232
      %p238 = scmp.eq.s32.totalorder %s22, 0
      %p239 = por %p237, %p238
      %p240 = scmp.ne.s32.totalorder %s229, %s232
      %p241 = scmp.eq.s32.totalorder %s27, 1
      %p242 = por %p240, %p241
      %p243 = scmp.ne.s32.totalorder %s232, %s233
      %p244 = scmp.eq.s32.totalorder %s27, 0
      %p245 = por %p243, %p244
      %p246 = scmp.ne.s32.totalorder %s232, %s233
      %p247 = scmp.eq.s32.totalorder %s28, 1
      %p248 = por %p246, %p247
      %p250 = scmp.ne.s32.totalorder %s233, %s249
      %p251 = scmp.eq.s32.totalorder %s28, 0
      %p252 = por %p250, %p251
      %p253 = scmp.le.s32.totalorder 1, %s22
      %p254 = scmp.lt.s32.totalorder %s22, 3
      %p255 = pnand %p253, %p254
      %p256 = pneg %p255
      // Predicated region
      $region9: #{tpu_custom_call.1} parent=5 // pred_check
        _
      $region10: #{tpu_custom_call.1} parent=5 // pred_check_branch
        %258 = sbr.rel (%p255) target = $region12
      $region11: #{tpu_custom_call.1} parent=5 // pred_region
        %s259 = ssub.s32 %s22, 1
        // Predicated region
        $region13: #{tpu_custom_call.1} parent=11 // pred_check
          %p260 = pneg %p55
        $region14: #{tpu_custom_call.1} parent=11 // pred_check_branch
          %262 = sbr.rel (%p260) target = $region16
        $region15: #{tpu_custom_call.1} parent=11 // pred_region
          %s264 = ssub.s32 1024, 1024
          %265 = vsyncadd [#allocation6], %s264
          %s266 = sshll.u32 [#allocation5], 4
          %s267 = int_to_ptr.vmem [resolvable:$true] %s266
          %272 = dma.hbm_to_vmem [thread:$0]  %s1, 1024, %s267, [#allocation6], 128, 128, 8
        $region16: #{tpu_custom_call.1} parent=11 // pred_fallthru
          _
        // Predicated region
        $region17: #{tpu_custom_call.1} parent=11 // pred_check
          %p273 = pneg %p139
        $region18: #{tpu_custom_call.1} parent=11 // pred_check_branch
          %275 = sbr.rel (%p273) target = $region20
        $region19: #{tpu_custom_call.1} parent=11 // pred_region
          %p276 = scmp.lt.s32.totalorder %s32, 0
          %s277 = scalar_select %p276, %s32, 0
          %s278 = scalar_lea.vmem %s4, %s277
        $region20: #{tpu_custom_call.1} parent=11 // pred_fallthru
          _
        // Predicated region
        $region21: #{tpu_custom_call.1} parent=11 // pred_check
          %p279 = pneg %p165
        $region22: #{tpu_custom_call.1} parent=11 // pred_check_branch
          %281 = sbr.rel (%p279) target = $region24
        $region23: #{tpu_custom_call.1} parent=11 // pred_region
          %p282 = scmp.lt.s32.totalorder %s32, 0
          %s283 = scalar_select %p282, %s32, 0
          %s284 = scalar_lea.vmem %s5, %s283
        $region24: #{tpu_custom_call.1} parent=11 // pred_fallthru
          _
        // Predicated region
        $region25: #{tpu_custom_call.1} parent=11 // pred_check
          %p285 = pneg %p191
        $region26: #{tpu_custom_call.1} parent=11 // pred_check_branch
          %287 = sbr.rel (%p285) target = $region28
        $region27: #{tpu_custom_call.1} parent=11 // pred_region
          %p288 = scmp.lt.s32.totalorder %s32, 0
          %s289 = scalar_select %p288, %s32, 0
          %s290 = scalar_lea.vmem %s6, %s289
        $region28: #{tpu_custom_call.1} parent=11 // pred_fallthru
          _
        // Predicated region
        $region29: #{tpu_custom_call.1} parent=11 // pred_check
          %p291 = pneg %p217
        $region30: #{tpu_custom_call.1} parent=11 // pred_check_branch
          %293 = sbr.rel (%p291) target = $region32
        $region31: #{tpu_custom_call.1} parent=11 // pred_region
          %p294 = scmp.lt.s32.totalorder %s32, 0
          %s295 = scalar_select %p294, %s32, 0
          %s296 = scalar_lea.vmem %s7, %s295
        $region32: #{tpu_custom_call.1} parent=11 // pred_fallthru
          _
      $region12: #{tpu_custom_call.1} parent=5 // pred_fallthru
        _
      %p297 = scmp.lt.s32.totalorder %s22, 2
      // Predicated region
      $region33: #{tpu_custom_call.1} parent=5 // pred_check
        %p298 = pneg %p297
      $region34: #{tpu_custom_call.1} parent=5 // pred_check_branch
        %300 = sbr.rel (%p298) target = $region36
      $region35: #{tpu_custom_call.1} parent=5 // pred_region
        // Predicated region
        $region37: #{tpu_custom_call.1} parent=35 // pred_check
          %p301 = pneg %p79
        $region38: #{tpu_custom_call.1} parent=35 // pred_check_branch
          %303 = sbr.rel (%p301) target = $region40
        $region39: #{tpu_custom_call.1} parent=35 // pred_region
          %s304 = sand.u32 %s22, 1
          %s305 = scalar_lea.sflag [#allocation9], %s304
          %s306 = sand.u32 %s69, 1
          %s307 = smul.addr %s306, 128
          %s308 = scalar_lea.vmem [#allocation8], %s307
          %s309 = ssub.s32 1, %s29
          %s310 = smul.u32 %s30, %s309
          %s312 = ssub.s32 2048, 2048
          %313 = vsyncadd %s305, %s312
          %s314 = smul.addr %s310, 128
          %s315 = scalar_lea.hbm %s2, %s314
          %s316 = sshll.u32 %s308, 4
          %s317 = int_to_ptr.vmem [resolvable:$true] %s316
          %322 = dma.hbm_to_vmem [thread:$0]  %s315, 2048, %s317, %s305, 128, 128, 8
        $region40: #{tpu_custom_call.1} parent=35 // pred_fallthru
          _
        // Predicated region
        $region41: #{tpu_custom_call.1} parent=35 // pred_check
          %p323 = pneg %p107
        $region42: #{tpu_custom_call.1} parent=35 // pred_check_branch
          %325 = sbr.rel (%p323) target = $region44
        $region43: #{tpu_custom_call.1} parent=35 // pred_region
          %s326 = sand.u32 %s22, 1
          %s327 = scalar_lea.sflag [#allocation9], %s326
          %s328 = sand.u32 %s97, 1
          %s329 = smul.addr %s328, 128
          %s330 = scalar_lea.vmem [#allocation10], %s329
          %s331 = smul.u32 %s30, %s29
          %s333 = ssub.s32 2048, 2048
          %334 = vsyncadd %s327, %s333
          %s335 = smul.addr %s331, 128
          %s336 = scalar_lea.hbm %s3, %s335
          %s337 = sshll.u32 %s330, 4
          %s338 = int_to_ptr.vmem [resolvable:$true] %s337
          %343 = dma.hbm_to_vmem [thread:$0]  %s336, 2048, %s338, %s327, 128, 128, 8
        $region44: #{tpu_custom_call.1} parent=35 // pred_fallthru
          _
      $region36: #{tpu_custom_call.1} parent=5 // pred_fallthru
        _
      %p344 = scmp.le.s32.totalorder 1, %s22
      %p345 = scmp.lt.s32.totalorder %s22, 3
      %p346 = pnand %p344, %p345
      %p347 = pneg %p346
      // Predicated region
      $region45: #{tpu_custom_call.1} parent=5 // pred_check
        _
      $region46: #{tpu_custom_call.1} parent=5 // pred_check_branch
        %349 = sbr.rel (%p346) target = $region48
      $region47: #{tpu_custom_call.1} parent=5 // pred_region
        %s350 = ssub.s32 %s22, 1
        // Predicated region
        $region49: #{tpu_custom_call.1} parent=47 // pred_check
          %p351 = pneg %p55
        $region50: #{tpu_custom_call.1} parent=47 // pred_check_branch
          %353 = sbr.rel (%p351) target = $region52
        $region51: #{tpu_custom_call.1} parent=47 // pred_region
          %354 = dma.done [#allocation6], 1024
        $region52: #{tpu_custom_call.1} parent=47 // pred_fallthru
          _
        %s355 = sand.u32 %s27, 1
        %s356 = scalar_lea.sflag [#allocation9], %s355
        %s357 = sand.u32 %s72, 1
        %s358 = smul.addr %s357, 128
        %s359 = scalar_lea.vmem [#allocation8], %s358
        // Predicated region
        $region53: #{tpu_custom_call.1} parent=47 // pred_check
          %p360 = pneg %p85
        $region54: #{tpu_custom_call.1} parent=47 // pred_check_branch
          %362 = sbr.rel (%p360) target = $region56
        $region55: #{tpu_custom_call.1} parent=47 // pred_region
          %363 = dma.done %s356, 2048
        $region56: #{tpu_custom_call.1} parent=47 // pred_fallthru
          _
        %s364 = sand.u32 %s27, 1
        %s365 = scalar_lea.sflag [#allocation9], %s364
        %s366 = sand.u32 %s100, 1
        %s367 = smul.addr %s366, 128
        %s368 = scalar_lea.vmem [#allocation10], %s367
        // Predicated region
        $region57: #{tpu_custom_call.1} parent=47 // pred_check
          %p369 = pneg %p113
        $region58: #{tpu_custom_call.1} parent=47 // pred_check_branch
          %371 = sbr.rel (%p369) target = $region60
        $region59: #{tpu_custom_call.1} parent=47 // pred_region
          %372 = dma.done %s365, 2048
        $region60: #{tpu_custom_call.1} parent=47 // pred_fallthru
          _
        %p373 = pneg %p55
        %p374 = pneg %p52
        %s375 = sand.u32 %s27, 1
        %s376 = scalar_lea.sflag [#allocation9], %s375
        %s377 = sand.u32 %s72, 1
        %s378 = smul.addr %s377, 128
        %s379 = scalar_lea.vmem [#allocation8], %s378
        %p380 = pneg %p85
        %p381 = pneg %p82
        %s382 = sand.u32 %s27, 1
        %s383 = scalar_lea.sflag [#allocation9], %s382
        %s384 = sand.u32 %s100, 1
        %s385 = smul.addr %s384, 128
        %s386 = scalar_lea.vmem [#allocation10], %s385
        %p387 = pneg %p113
        %p388 = pneg %p110
        %p389 = scmp.lt.s32.totalorder %s32, 0
        %s390 = scalar_select %p389, %s32, 0
        %s391 = scalar_lea.vmem %s4, %s390
        %p392 = pneg %p139
        %p393 = pneg %p136
        %p394 = scmp.lt.s32.totalorder %s32, 0
        %s395 = scalar_select %p394, %s32, 0
        %s396 = scalar_lea.vmem %s5, %s395
        %p397 = pneg %p165
        %p398 = pneg %p162
        %p399 = scmp.lt.s32.totalorder %s32, 0
        %s400 = scalar_select %p399, %s32, 0
        %s401 = scalar_lea.vmem %s6, %s400
        %p402 = pneg %p191
        %p403 = pneg %p188
        %p404 = scmp.lt.s32.totalorder %s32, 0
        %s405 = scalar_select %p404, %s32, 0
        %s406 = scalar_lea.vmem %s7, %s405
        %p407 = pneg %p217
        %p408 = pneg %p214
        %p409 = pneg %p245
        %p410 = pneg %p242
        %s411 = sand.u32 %s232, 1
        %s412 = scalar_lea.sflag [#allocation7], %s411
        %s413 = sand.u32 %s232, 1
        %s414 = smul.addr %s413, 64
        %s415 = scalar_lea.vmem [#allocation11], %s414
        %s416 = ssub.s32 1, %s31
        %s417 = smul.u32 %s32, %s416
        %s418 = smul.u32 %s32, %s31
        %p419 = scmp.lt.s32.totalorder %s32, 0
        %s420 = scalar_select %p419, %s32, 0
        %s421 = scalar_lea.vmem %s4, %s420
        %p422 = scmp.lt.s32.totalorder %s32, 0
        %s423 = scalar_select %p422, %s32, 0
        %s424 = scalar_lea.vmem %s5, %s423
        %p425 = scmp.lt.s32.totalorder %s32, 0
        %s426 = scalar_select %p425, %s32, 0
        %s427 = scalar_lea.vmem %s6, %s426
        %p428 = scmp.lt.s32.totalorder %s32, 0
        %s429 = scalar_select %p428, %s32, 0
        %s430 = scalar_lea.vmem %s7, %s429
        %s431 = smul.u32 %s32, %s31
        %s432 = smul.u32 %s32, 128
        %p433 = scmp.eq.s32.totalorder %s31, 0
        // Predicated region
        $region61: #{tpu_custom_call.1} parent=47 // pred_check
          %p434 = pneg %p433
        $region62: #{tpu_custom_call.1} parent=47 // pred_check_branch
          %436 = sbr.rel (%p434) target = $region64
        $region63: #{tpu_custom_call.1} parent=47 // pred_region
          %v437 = vld [vmem:[#allocation5] sm:$0xff]
          %v438 = vld [vmem:[#allocation5 + $0x8] sm:$0xff]
          %v439 = vld [vmem:[#allocation5 + $0x10] sm:$0xff]
          %v440 = vld [vmem:[#allocation5 + $0x18] sm:$0xff]
          %v441 = vld [vmem:[#allocation5 + $0x20] sm:$0xff]
          %v442 = vld [vmem:[#allocation5 + $0x28] sm:$0xff]
          %v443 = vld [vmem:[#allocation5 + $0x30] sm:$0xff]
          %v444 = vld [vmem:[#allocation5 + $0x38] sm:$0xff]
          %v445 = vld [vmem:[%s359] sm:$0xff]
          %v446 = vld [vmem:[%s359 + $0x8] sm:$0xff]
          %v447 = vld [vmem:[%s359 + $0x10] sm:$0xff]
          %v448 = vld [vmem:[%s359 + $0x18] sm:$0xff]
          %v449 = vld [vmem:[%s359 + $0x20] sm:$0xff]
          %v450 = vld [vmem:[%s359 + $0x28] sm:$0xff]
          %v451 = vld [vmem:[%s359 + $0x30] sm:$0xff]
          %v452 = vld [vmem:[%s359 + $0x38] sm:$0xff]
          %v453 = vld [vmem:[%s359 + $0x40] sm:$0xff]
          %v454 = vld [vmem:[%s359 + $0x48] sm:$0xff]
          %v455 = vld [vmem:[%s359 + $0x50] sm:$0xff]
          %v456 = vld [vmem:[%s359 + $0x58] sm:$0xff]
          %v457 = vld [vmem:[%s359 + $0x60] sm:$0xff]
          %v458 = vld [vmem:[%s359 + $0x68] sm:$0xff]
          %v459 = vld [vmem:[%s359 + $0x70] sm:$0xff]
          %v460 = vld [vmem:[%s359 + $0x78] sm:$0xff]
          %461 = vmatprep.subr.mxu0 0.0
          %462 = vmatpush1.msra.mxu0 %v445
          %463 = vmatprep.subr.mxu0 0.0
          %464 = vmatpush1.msra.mxu0 %v446
          %465 = vmatprep.subr.mxu0 0.0
          %466 = vmatpush1.msra.mxu0 %v447
          %467 = vmatprep.subr.mxu0 0.0
          %468 = vmatpush1.msra.mxu0 %v448
          %469 = vmatprep.subr.mxu0 0.0
          %470 = vmatpush1.msra.mxu0 %v449
          %471 = vmatprep.subr.mxu0 0.0
          %472 = vmatpush1.msra.mxu0 %v450
          %473 = vmatprep.subr.mxu0 0.0
          %474 = vmatpush1.msra.mxu0 %v451
          %475 = vmatprep.subr.mxu0 0.0
          %476 = vmatpush1.msra.mxu0 %v452
          %477 = vmatprep.subr.mxu0 0.0
          %478 = vmatpush1.msra.mxu0 %v453
          %479 = vmatprep.subr.mxu0 0.0
          %480 = vmatpush1.msra.mxu0 %v454
          %481 = vmatprep.subr.mxu0 0.0
          %482 = vmatpush1.msra.mxu0 %v455
          %483 = vmatprep.subr.mxu0 0.0
          %484 = vmatpush1.msra.mxu0 %v456
          %485 = vmatprep.subr.mxu0 0.0
          %486 = vmatpush1.msra.mxu0 %v457
          %487 = vmatprep.subr.mxu0 0.0
          %488 = vmatpush1.msra.mxu0 %v458
          %489 = vmatprep.subr.mxu0 0.0
          %490 = vmatpush1.msra.mxu0 %v459
          %491 = vmatprep.subr.mxu0 0.0
          %492 = vmatpush1.msra.mxu0 %v460
          %493 = vmatprep.subr.mxu0 0.0
          %494 = vmatpush1.msra.mxu0 0.0
          %495 = vmatprep.subr.mxu0 0.0
          %496 = vmatpush1.msra.mxu0 0.0
          %497 = vmatprep.subr.mxu0 0.0
          %498 = vmatpush1.msra.mxu0 0.0
          %499 = vmatprep.subr.mxu0 0.0
          %500 = vmatpush1.msra.mxu0 0.0
          %501 = vmatprep.subr.mxu0 0.0
          %502 = vmatpush1.msra.mxu0 0.0
          %503 = vmatprep.subr.mxu0 0.0
          %504 = vmatpush1.msra.mxu0 0.0
          %505 = vmatprep.subr.mxu0 0.0
          %506 = vmatpush1.msra.mxu0 0.0
          %507 = vmatprep.subr.mxu0 0.0
          %508 = vmatpush1.msra.mxu0 0.0
          %509 = vmatprep.subr.mxu0 0.0
          %510 = vmatpush1.msra.mxu0 0.0
          %511 = vmatprep.subr.mxu0 0.0
          %512 = vmatpush1.msra.mxu0 0.0
          %513 = vmatprep.subr.mxu0 0.0
          %514 = vmatpush1.msra.mxu0 0.0
          %515 = vmatprep.subr.mxu0 0.0
          %516 = vmatpush1.msra.mxu0 0.0
          %517 = vmatprep.subr.mxu0 0.0
          %518 = vmatpush1.msra.mxu0 0.0
          %519 = vmatprep.subr.mxu0 0.0
          %520 = vmatpush1.msra.mxu0 0.0
          %521 = vmatprep.subr.mxu0 0.0
          %522 = vmatpush1.msra.mxu0 0.0
          %523 = vmatprep.subr.mxu0 0.0
          %524 = vmatpush1.msra.mxu0 0.0
          %525 = vmatprep.mubr.f32.mxu0 0.0
          %526 = vmatmul.mubr.f32.gmra.mrb[0].mxu0 %v437
          %v527 = vpop.f32.mrb[0].mxu0
          %v528 = vadd.f32 0.0, %v527
          %v529 = vpop.f32.mrb[0].mxu0
          %530 = vmatprep.mubr.f32.mxu0 0.0
          %531 = vmatmul.mubr.f32.gmra.mrb[0].mxu0 %v438
          %v532 = vpop.f32.mrb[0].mxu0
          %v533 = vadd.f32 0.0, %v532
          %v534 = vpop.f32.mrb[0].mxu0
          %535 = vmatprep.mubr.f32.mxu0 0.0
          %536 = vmatmul.mubr.f32.gmra.mrb[0].mxu0 %v439
          %v537 = vpop.f32.mrb[0].mxu0
          %v538 = vadd.f32 0.0, %v537
          %v539 = vpop.f32.mrb[0].mxu0
          %540 = vmatprep.mubr.f32.mxu0 0.0
          %541 = vmatmul.mubr.f32.gmra.mrb[0].mxu0 %v440
          %v542 = vpop.f32.mrb[0].mxu0
          %v543 = vadd.f32 0.0, %v542
          %v544 = vpop.f32.mrb[0].mxu0
          %545 = vmatprep.mubr.f32.mxu0 0.0
          %546 = vmatmul.mubr.f32.gmra.mrb[0].mxu0 %v441
          %v547 = vpop.f32.mrb[0].mxu0
          %v548 = vadd.f32 0.0, %v547
          %v549 = vpop.f32.mrb[0].mxu0
          %550 = vmatprep.mubr.f32.mxu0 0.0
          %551 = vmatmul.mubr.f32.gmra.mrb[0].mxu0 %v442
          %v552 = vpop.f32.mrb[0].mxu0
          %v553 = vadd.f32 0.0, %v552
          %v554 = vpop.f32.mrb[0].mxu0
          %555 = vmatprep.mubr.f32.mxu0 0.0
          %556 = vmatmul.mubr.f32.gmra.mrb[0].mxu0 %v443
          %v557 = vpop.f32.mrb[0].mxu0
          %v558 = vadd.f32 0.0, %v557
          %v559 = vpop.f32.mrb[0].mxu0
          %560 = vmatprep.mubr.f32.mxu0 0.0
          %561 = vmatmul.mubr.f32.gmra.mrb[0].mxu0 %v444
          %v562 = vpop.f32.mrb[0].mxu0
          %v563 = vadd.f32 0.0, %v562
          %v564 = vpop.f32.mrb[0].mxu0
          %565 = vdwg.mxu0
          %v566 = vld [vmem:[%s421] sm:$0x1]
          %v567 = vld [vmem:[%s424] sm:$0x1]
          %v568 = vadd.f32 %v528, %v533
          %v569 = vadd.f32 %v568, %v538
          %v570 = vadd.f32 %v569, %v543
          %v571 = vadd.f32 %v570, %v548
          %v572 = vadd.f32 %v571, %v553
          %v573 = vadd.f32 %v572, %v558
          %v574 = vadd.f32 %v573, %v563
          %v575 = vrot.slane %v574, 4
          %v576 = vadd.f32 %v574, %v575
          %v577 = vrot.slane %v576, 2
          %v578 = vadd.f32 %v576, %v577
          %v579 = vrot.slane %v578, 1
          %v580 = vadd.f32 %v578, %v579
          %v581 = vrcp.pop 64.0
          %v582 = vmul.f32 %v580, %v581
          %v583 = vsub.f32 %v528, %v582
          %v584 = vsub.f32 %v533, %v582
          %v585 = vsub.f32 %v538, %v582
          %v586 = vsub.f32 %v543, %v582
          %v587 = vsub.f32 %v548, %v582
          %v588 = vsub.f32 %v553, %v582
          %v589 = vsub.f32 %v558, %v582
          %v590 = vsub.f32 %v563, %v582
          %v591 = vmul.f32 %v583, %v583
          %v592 = vmul.f32 %v584, %v584
          %v593 = vmul.f32 %v585, %v585
          %v594 = vmul.f32 %v586, %v586
          %v595 = vmul.f32 %v587, %v587
          %v596 = vmul.f32 %v588, %v588
          %v597 = vmul.f32 %v589, %v589
          %v598 = vmul.f32 %v590, %v590
          %v599 = vadd.f32 %v591, %v592
          %v600 = vadd.f32 %v599, %v593
          %v601 = vadd.f32 %v600, %v594
          %v602 = vadd.f32 %v601, %v595
          %v603 = vadd.f32 %v602, %v596
          %v604 = vadd.f32 %v603, %v597
          %v605 = vadd.f32 %v604, %v598
          %v606 = vrot.slane %v605, 4
          %v607 = vadd.f32 %v605, %v606
          %v608 = vrot.slane %v607, 2
          %v609 = vadd.f32 %v607, %v608
          %v610 = vrot.slane %v609, 1
          %v611 = vadd.f32 %v609, %v610
          %v612 = vmul.f32 %v611, %v581
          %v613 = vadd.f32 %v612, 1e-05
          %v614 = vrsqrt.pop %v613
          %v615 = vmul.f32 %v566, %v614
          %v616 = vmul.f32 %v582, %v615
          %v617 = vsub.f32 %v567, %v616
          %v619 = vlaneseq
          %v620 = vshrl.u32 %v619, 7
          %v621 = vsub.s32 0, %v620
          %v622 = vrot.slane %v615, %v621
          %v624 = vmul.f32 %v528, %v622
          %v625 = vmul.f32 %v533, %v622
          %v626 = vmul.f32 %v538, %v622
          %v627 = vmul.f32 %v543, %v622
          %v628 = vmul.f32 %v548, %v622
          %v629 = vmul.f32 %v553, %v622
          %v630 = vmul.f32 %v558, %v622
          %v631 = vmul.f32 %v563, %v622
          %v633 = vlaneseq
          %v634 = vshrl.u32 %v633, 7
          %v635 = vsub.s32 0, %v634
          %v636 = vrot.slane %v617, %v635
          %v638 = vadd.f32 %v624, %v636
          %v639 = vadd.f32 %v625, %v636
          %v640 = vadd.f32 %v626, %v636
          %v641 = vadd.f32 %v627, %v636
          %v642 = vadd.f32 %v628, %v636
          %v643 = vadd.f32 %v629, %v636
          %v644 = vadd.f32 %v630, %v636
          %v645 = vadd.f32 %v631, %v636
          %v646 = vmax.f32 %v638, 0.0
          %v647 = vmax.f32 %v639, 0.0
          %v648 = vmax.f32 %v640, 0.0
          %v649 = vmax.f32 %v641, 0.0
          %v650 = vmax.f32 %v642, 0.0
          %v651 = vmax.f32 %v643, 0.0
          %v652 = vmax.f32 %v644, 0.0
          %v653 = vmax.f32 %v645, 0.0
          %s654 = sshra.s32 %s432, 7
          %s655 = sand.u32 %s432, 127
          %s656 = scalar_lea.vmem [#allocation2], %s654
          %657 = vst [vmem:[%s656] sm:$0xff] %v646
          %658 = vst [vmem:[%s656 + $0x8] sm:$0xff] %v647
          %659 = vst [vmem:[%s656 + $0x10] sm:$0xff] %v648
          %660 = vst [vmem:[%s656 + $0x18] sm:$0xff] %v649
          %661 = vst [vmem:[%s656 + $0x20] sm:$0xff] %v650
          %662 = vst [vmem:[%s656 + $0x28] sm:$0xff] %v651
          %663 = vst [vmem:[%s656 + $0x30] sm:$0xff] %v652
          %664 = vst [vmem:[%s656 + $0x38] sm:$0xff] %v653
        $region64: #{tpu_custom_call.1} parent=47 // pred_fallthru
          _
        %p665 = scmp.eq.s32.totalorder %s31, 1
        // Predicated region
        $region65: #{tpu_custom_call.1} parent=47 // pred_check
          %p666 = pneg %p665
        $region66: #{tpu_custom_call.1} parent=47 // pred_check_branch
          %668 = sbr.rel (%p666) target = $region68
        $region67: #{tpu_custom_call.1} parent=47 // pred_region
          %v669 = vld [vmem:[#allocation2] sm:$0xff]
          %v670 = vld [vmem:[#allocation2 + $0x8] sm:$0xff]
          %v671 = vld [vmem:[#allocation2 + $0x10] sm:$0xff]
          %v672 = vld [vmem:[#allocation2 + $0x18] sm:$0xff]
          %v673 = vld [vmem:[#allocation2 + $0x20] sm:$0xff]
          %v674 = vld [vmem:[#allocation2 + $0x28] sm:$0xff]
          %v675 = vld [vmem:[#allocation2 + $0x30] sm:$0xff]
          %v676 = vld [vmem:[#allocation2 + $0x38] sm:$0xff]
          %v677 = vld [vmem:[%s368] sm:$0xff]
          %v678 = vld [vmem:[%s368 + $0x8] sm:$0xff]
          %v679 = vld [vmem:[%s368 + $0x10] sm:$0xff]
          %v680 = vld [vmem:[%s368 + $0x18] sm:$0xff]
          %v681 = vld [vmem:[%s368 + $0x20] sm:$0xff]
          %v682 = vld [vmem:[%s368 + $0x28] sm:$0xff]
          %v683 = vld [vmem:[%s368 + $0x30] sm:$0xff]
          %v684 = vld [vmem:[%s368 + $0x38] sm:$0xff]
          %v685 = vld [vmem:[%s368 + $0x40] sm:$0xff]
          %v686 = vld [vmem:[%s368 + $0x48] sm:$0xff]
          %v687 = vld [vmem:[%s368 + $0x50] sm:$0xff]
          %v688 = vld [vmem:[%s368 + $0x58] sm:$0xff]
          %v689 = vld [vmem:[%s368 + $0x60] sm:$0xff]
          %v690 = vld [vmem:[%s368 + $0x68] sm:$0xff]
          %v691 = vld [vmem:[%s368 + $0x70] sm:$0xff]
          %v692 = vld [vmem:[%s368 + $0x78] sm:$0xff]
          %693 = vmatprep.subr.mxu0 0.0
          %694 = vmatpush1.msra.mxu0 %v677
          %695 = vmatprep.subr.mxu0 0.0
          %696 = vmatpush1.msra.mxu0 %v678
          %697 = vmatprep.subr.mxu0 0.0
          %698 = vmatpush1.msra.mxu0 %v679
          %699 = vmatprep.subr.mxu0 0.0
          %700 = vmatpush1.msra.mxu0 %v680
          %701 = vmatprep.subr.mxu0 0.0
          %702 = vmatpush1.msra.mxu0 %v681
          %703 = vmatprep.subr.mxu0 0.0
          %704 = vmatpush1.msra.mxu0 %v682
          %705 = vmatprep.subr.mxu0 0.0
          %706 = vmatpush1.msra.mxu0 %v683
          %707 = vmatprep.subr.mxu0 0.0
          %708 = vmatpush1.msra.mxu0 %v684
          %709 = vmatprep.subr.mxu0 0.0
          %710 = vmatpush1.msra.mxu0 %v685
          %711 = vmatprep.subr.mxu0 0.0
          %712 = vmatpush1.msra.mxu0 %v686
          %713 = vmatprep.subr.mxu0 0.0
          %714 = vmatpush1.msra.mxu0 %v687
          %715 = vmatprep.subr.mxu0 0.0
          %716 = vmatpush1.msra.mxu0 %v688
          %717 = vmatprep.subr.mxu0 0.0
          %718 = vmatpush1.msra.mxu0 %v689
          %719 = vmatprep.subr.mxu0 0.0
          %720 = vmatpush1.msra.mxu0 %v690
          %721 = vmatprep.subr.mxu0 0.0
          %722 = vmatpush1.msra.mxu0 %v691
          %723 = vmatprep.subr.mxu0 0.0
          %724 = vmatpush1.msra.mxu0 %v692
          %725 = vmatprep.subr.mxu0 0.0
          %726 = vmatpush1.msra.mxu0 0.0
          %727 = vmatprep.subr.mxu0 0.0
          %728 = vmatpush1.msra.mxu0 0.0
          %729 = vmatprep.subr.mxu0 0.0
          %730 = vmatpush1.msra.mxu0 0.0
          %731 = vmatprep.subr.mxu0 0.0
          %732 = vmatpush1.msra.mxu0 0.0
          %733 = vmatprep.subr.mxu0 0.0
          %734 = vmatpush1.msra.mxu0 0.0
          %735 = vmatprep.subr.mxu0 0.0
          %736 = vmatpush1.msra.mxu0 0.0
          %737 = vmatprep.subr.mxu0 0.0
          %738 = vmatpush1.msra.mxu0 0.0
          %739 = vmatprep.subr.mxu0 0.0
          %740 = vmatpush1.msra.mxu0 0.0
          %741 = vmatprep.subr.mxu0 0.0
          %742 = vmatpush1.msra.mxu0 0.0
          %743 = vmatprep.subr.mxu0 0.0
          %744 = vmatpush1.msra.mxu0 0.0
          %745 = vmatprep.subr.mxu0 0.0
          %746 = vmatpush1.msra.mxu0 0.0
          %747 = vmatprep.subr.mxu0 0.0
          %748 = vmatpush1.msra.mxu0 0.0
          %749 = vmatprep.subr.mxu0 0.0
          %750 = vmatpush1.msra.mxu0 0.0
          %751 = vmatprep.subr.mxu0 0.0
          %752 = vmatpush1.msra.mxu0 0.0
          %753 = vmatprep.subr.mxu0 0.0
          %754 = vmatpush1.msra.mxu0 0.0
          %755 = vmatprep.subr.mxu0 0.0
          %756 = vmatpush1.msra.mxu0 0.0
          %757 = vmatprep.mubr.f32.mxu0 0.0
          %758 = vmatmul.mubr.f32.gmra.mrb[0].mxu0 %v669
          %v759 = vpop.f32.mrb[0].mxu0
          %v760 = vadd.f32 0.0, %v759
          %v761 = vpop.f32.mrb[0].mxu0
          %762 = vmatprep.mubr.f32.mxu0 0.0
          %763 = vmatmul.mubr.f32.gmra.mrb[0].mxu0 %v670
          %v764 = vpop.f32.mrb[0].mxu0
          %v765 = vadd.f32 0.0, %v764
          %v766 = vpop.f32.mrb[0].mxu0
          %767 = vmatprep.mubr.f32.mxu0 0.0
          %768 = vmatmul.mubr.f32.gmra.mrb[0].mxu0 %v671
          %v769 = vpop.f32.mrb[0].mxu0
          %v770 = vadd.f32 0.0, %v769
          %v771 = vpop.f32.mrb[0].mxu0
          %772 = vmatprep.mubr.f32.mxu0 0.0
          %773 = vmatmul.mubr.f32.gmra.mrb[0].mxu0 %v672
          %v774 = vpop.f32.mrb[0].mxu0
          %v775 = vadd.f32 0.0, %v774
          %v776 = vpop.f32.mrb[0].mxu0
          %777 = vmatprep.mubr.f32.mxu0 0.0
          %778 = vmatmul.mubr.f32.gmra.mrb[0].mxu0 %v673
          %v779 = vpop.f32.mrb[0].mxu0
          %v780 = vadd.f32 0.0, %v779
          %v781 = vpop.f32.mrb[0].mxu0
          %782 = vmatprep.mubr.f32.mxu0 0.0
          %783 = vmatmul.mubr.f32.gmra.mrb[0].mxu0 %v674
          %v784 = vpop.f32.mrb[0].mxu0
          %v785 = vadd.f32 0.0, %v784
          %v786 = vpop.f32.mrb[0].mxu0
          %787 = vmatprep.mubr.f32.mxu0 0.0
          %788 = vmatmul.mubr.f32.gmra.mrb[0].mxu0 %v675
          %v789 = vpop.f32.mrb[0].mxu0
          %v790 = vadd.f32 0.0, %v789
          %v791 = vpop.f32.mrb[0].mxu0
          %792 = vmatprep.mubr.f32.mxu0 0.0
          %793 = vmatmul.mubr.f32.gmra.mrb[0].mxu0 %v676
          %v794 = vpop.f32.mrb[0].mxu0
          %v795 = vadd.f32 0.0, %v794
          %v796 = vpop.f32.mrb[0].mxu0
          %797 = vdwg.mxu0
          %v798 = vld [vmem:[%s427] sm:$0x1]
          %v799 = vld [vmem:[%s430] sm:$0x1]
          %v800 = vadd.f32 %v760, %v765
          %v801 = vadd.f32 %v800, %v770
          %v802 = vadd.f32 %v801, %v775
          %v803 = vadd.f32 %v802, %v780
          %v804 = vadd.f32 %v803, %v785
          %v805 = vadd.f32 %v804, %v790
          %v806 = vadd.f32 %v805, %v795
          %v807 = vrot.slane %v806, 4
          %v808 = vadd.f32 %v806, %v807
          %v809 = vrot.slane %v808, 2
          %v810 = vadd.f32 %v808, %v809
          %v811 = vrot.slane %v810, 1
          %v812 = vadd.f32 %v810, %v811
          %v813 = vrcp.pop 64.0
          %v814 = vmul.f32 %v812, %v813
          %v815 = vsub.f32 %v760, %v814
          %v816 = vsub.f32 %v765, %v814
          %v817 = vsub.f32 %v770, %v814
          %v818 = vsub.f32 %v775, %v814
          %v819 = vsub.f32 %v780, %v814
          %v820 = vsub.f32 %v785, %v814
          %v821 = vsub.f32 %v790, %v814
          %v822 = vsub.f32 %v795, %v814
          %v823 = vmul.f32 %v815, %v815
          %v824 = vmul.f32 %v816, %v816
          %v825 = vmul.f32 %v817, %v817
          %v826 = vmul.f32 %v818, %v818
          %v827 = vmul.f32 %v819, %v819
          %v828 = vmul.f32 %v820, %v820
          %v829 = vmul.f32 %v821, %v821
          %v830 = vmul.f32 %v822, %v822
          %v831 = vadd.f32 %v823, %v824
          %v832 = vadd.f32 %v831, %v825
          %v833 = vadd.f32 %v832, %v826
          %v834 = vadd.f32 %v833, %v827
          %v835 = vadd.f32 %v834, %v828
          %v836 = vadd.f32 %v835, %v829
          %v837 = vadd.f32 %v836, %v830
          %v838 = vrot.slane %v837, 4
          %v839 = vadd.f32 %v837, %v838
          %v840 = vrot.slane %v839, 2
          %v841 = vadd.f32 %v839, %v840
          %v842 = vrot.slane %v841, 1
          %v843 = vadd.f32 %v841, %v842
          %v844 = vmul.f32 %v843, %v813
          %v845 = vadd.f32 %v844, 1e-05
          %v846 = vrsqrt.pop %v845
          %v847 = vmul.f32 %v798, %v846
          %v848 = vmul.f32 %v814, %v847
          %v849 = vsub.f32 %v799, %v848
          %v851 = vlaneseq
          %v852 = vshrl.u32 %v851, 7
          %v853 = vsub.s32 0, %v852
          %v854 = vrot.slane %v847, %v853
          %v856 = vmul.f32 %v760, %v854
          %v857 = vmul.f32 %v765, %v854
          %v858 = vmul.f32 %v770, %v854
          %v859 = vmul.f32 %v775, %v854
          %v860 = vmul.f32 %v780, %v854
          %v861 = vmul.f32 %v785, %v854
          %v862 = vmul.f32 %v790, %v854
          %v863 = vmul.f32 %v795, %v854
          %v865 = vlaneseq
          %v866 = vshrl.u32 %v865, 7
          %v867 = vsub.s32 0, %v866
          %v868 = vrot.slane %v849, %v867
          %v870 = vadd.f32 %v856, %v868
          %v871 = vadd.f32 %v857, %v868
          %v872 = vadd.f32 %v858, %v868
          %v873 = vadd.f32 %v859, %v868
          %v874 = vadd.f32 %v860, %v868
          %v875 = vadd.f32 %v861, %v868
          %v876 = vadd.f32 %v862, %v868
          %v877 = vadd.f32 %v863, %v868
          %v878 = vmax.f32 %v870, 0.0
          %v879 = vmax.f32 %v871, 0.0
          %v880 = vmax.f32 %v872, 0.0
          %v881 = vmax.f32 %v873, 0.0
          %v882 = vmax.f32 %v874, 0.0
          %v883 = vmax.f32 %v875, 0.0
          %v884 = vmax.f32 %v876, 0.0
          %v885 = vmax.f32 %v877, 0.0
          %s886 = sshra.s32 %s432, 7
          %s887 = sand.u32 %s432, 127
          %s888 = scalar_lea.vmem [#allocation5], %s886
          %v889 = vld [vmem:[%s888] sm:$0xff]
          %v890 = vld [vmem:[%s888 + $0x8] sm:$0xff]
          %v891 = vld [vmem:[%s888 + $0x10] sm:$0xff]
          %v892 = vld [vmem:[%s888 + $0x18] sm:$0xff]
          %v893 = vld [vmem:[%s888 + $0x20] sm:$0xff]
          %v894 = vld [vmem:[%s888 + $0x28] sm:$0xff]
          %v895 = vld [vmem:[%s888 + $0x30] sm:$0xff]
          %v896 = vld [vmem:[%s888 + $0x38] sm:$0xff]
          %v897 = vadd.f32 %v889, %v878
          %v898 = vadd.f32 %v890, %v879
          %v899 = vadd.f32 %v891, %v880
          %v900 = vadd.f32 %v892, %v881
          %v901 = vadd.f32 %v893, %v882
          %v902 = vadd.f32 %v894, %v883
          %v903 = vadd.f32 %v895, %v884
          %v904 = vadd.f32 %v896, %v885
          %905 = vst [vmem:[%s415] sm:$0xff] %v897
          %906 = vst [vmem:[%s415 + $0x8] sm:$0xff] %v898
          %907 = vst [vmem:[%s415 + $0x10] sm:$0xff] %v899
          %908 = vst [vmem:[%s415 + $0x18] sm:$0xff] %v900
          %909 = vst [vmem:[%s415 + $0x20] sm:$0xff] %v901
          %910 = vst [vmem:[%s415 + $0x28] sm:$0xff] %v902
          %911 = vst [vmem:[%s415 + $0x30] sm:$0xff] %v903
          %912 = vst [vmem:[%s415 + $0x38] sm:$0xff] %v904
        $region68: #{tpu_custom_call.1} parent=47 // pred_fallthru
          _
        %s913 = sand.u32 %s232, 1
        %s914 = scalar_lea.sflag [#allocation7], %s913
        %s915 = sand.u32 %s232, 1
        %s916 = smul.addr %s915, 64
        %s917 = scalar_lea.vmem [#allocation11], %s916
        // Predicated region
        $region69: #{tpu_custom_call.1} parent=47 // pred_check
          %p918 = pneg %p242
        $region70: #{tpu_custom_call.1} parent=47 // pred_check_branch
          %920 = sbr.rel (%p918) target = $region72
        $region71: #{tpu_custom_call.1} parent=47 // pred_region
          %s921 = smul.u32 %s32, %s31
          %s923 = ssub.s32 1024, 1024
          %924 = vsyncadd %s914, %s923
          %s925 = smul.addr %s921, 128
          %s926 = scalar_lea.hbm %s8, %s925
          %s927 = sshll.u32 %s917, 4
          %s928 = int_to_ptr.vmem [resolvable:$true] %s927
          %933 = dma.vmem_to_hbm [thread:$0]  %s928, 1024, %s926, %s914, 128, 128, 8
        $region72: #{tpu_custom_call.1} parent=47 // pred_fallthru
          _
      $region48: #{tpu_custom_call.1} parent=5 // pred_fallthru
        _
      %p934 = scmp.le.s32.totalorder 2, %s22
      // Predicated region
      $region73: #{tpu_custom_call.1} parent=5 // pred_check
        %p935 = pneg %p934
      $region74: #{tpu_custom_call.1} parent=5 // pred_check_branch
        %937 = sbr.rel (%p935) target = $region76
      $region75: #{tpu_custom_call.1} parent=5 // pred_region
        %s938 = ssub.s32 %s22, 2
        // Predicated region
        $region77: #{tpu_custom_call.1} parent=75 // pred_check
          %p939 = pneg %p248
        $region78: #{tpu_custom_call.1} parent=75 // pred_check_branch
          %941 = sbr.rel (%p939) target = $region80
        $region79: #{tpu_custom_call.1} parent=75 // pred_region
          %s942 = sand.u32 %s233, 1
          %s943 = scalar_lea.sflag [#allocation7], %s942
          %s944 = sand.u32 %s233, 1
          %s945 = smul.addr %s944, 64
          %s946 = scalar_lea.vmem [#allocation11], %s945
          %947 = dma.done %s943, 1024
        $region80: #{tpu_custom_call.1} parent=75 // pred_fallthru
          _
      $region76: #{tpu_custom_call.1} parent=5 // pred_fallthru
        _
    $region6: #{tpu_custom_call.1} parent=1 // loop_footer
      %s26 = sadd.s32 1, %s22
    $region7: #{tpu_custom_call.1} parent=1 // loop_footer_branch
      %21 = sbr.rel target = $region3
    $region8: #{tpu_custom_call.1} parent=1 // loop_exit
      _
    %948 = vsyncpa [#allocation6], 1
    %s949 = scalar_lea.sflag [#allocation6], 1
    %950 = vsyncpa %s949, 1
    %951 = vsyncpa [#allocation9], 1
    %s952 = scalar_lea.sflag [#allocation9], 1
    %953 = vsyncpa %s952, 1
    %954 = vsyncpa [#allocation7], 1
    %s955 = scalar_lea.sflag [#allocation7], 1
    %956 = vsyncpa %s955, 1

</llo_original>
